<compile_context>
chip_gen: v5e
topology: v5e:2x2
jax: 0.10.0
libtpu: 0.0.40
codegen_flags: <defaults>
</compile_context>

<pallas_src>
import functools

import jax
import jax.numpy as jnp
import numpy as np
from jax.experimental import pallas as pl
from jax.experimental.pallas import tpu as pltpu


def _sine_pos_kernel(nm_ref, m_ref, invd_ref, ph_ref, out_ref):
    # nm_ref:   (bt, 1, HW)   f32  flattened not_mask for bt batch elements
    # m_ref:    (HW, 4*HW)    f32  [cumsum_y | cumsum_x | denom_y | denom_x]
    # invd_ref: (D, 1)        f32  1 / dim_t per output channel
    # ph_ref:   (D, 1)        f32  0 (even ch -> sin) or pi/2 (odd ch -> cos)
    # out_ref:  (bt, 2*D, HW) f32  channel-major output block
    bt = nm_ref.shape[0]
    hw = nm_ref.shape[2]
    d = invd_ref.shape[0]

    m = m_ref[...]                       # resident constant (no re-DMA)
    inv_d = invd_ref[...]                # (D, 1)
    ph = ph_ref[...]                     # (D, 1)

    for b in range(bt):                  # static unroll; bt is small
        nm = nm_ref[b]                   # (1, HW)
        # One MXU matmul yields both cumsums and both (pre-tiled) denominators.
        res = jnp.dot(nm, m, preferred_element_type=jnp.float32)   # (1, 4*HW)
        y = res[:, 0:hw] * pl.reciprocal(res[:, 2 * hw:3 * hw] + 1e-6,
                                         approx=False)
        x = res[:, hw:2 * hw] * pl.reciprocal(res[:, 3 * hw:4 * hw] + 1e-6,
                                              approx=False)
        # (1, HW) * (D, 1) + (D, 1) -> (D, HW); a single sin covers both the
        # sin (even) and cos (odd) channels via the pi/2 phase.
        out_ref[b, 0:d, :] = jnp.sin(y * inv_d + ph)        # pos_y channels
        out_ref[b, d:2 * d, :] = jnp.sin(x * inv_d + ph)    # pos_x channels


def _choose_batch_block(batch, out_bytes_per_batch_elem):
    """Largest bt dividing `batch` that keeps >=2 grid steps and small blocks."""
    budget = 8 << 20                      # conservative; fits every chip's VMEM
    best = 1
    for bt in range(1, batch + 1):
        if batch % bt:
            continue
        if bt * out_bytes_per_batch_elem * 2 > budget:   # x2: double buffering
            break
        if batch >= 2 and batch // bt < 2:               # keep both TCs fed
            break
        best = bt
    return best


@functools.partial(jax.jit, static_argnums=(1,))
def sine_position_embedding(pad_mask, num_features):
    """pad_mask: bool (B, H, W). Returns float32 (B, num_features, H, W)."""
    B, H, W = pad_mask.shape
    assert num_features % 2 == 0
    D = num_features // 2
    HW = H * W
    temperature = 10000.0

    # not_mask, flattened so the kernel's lane axis is H*W (lane-dense).
    nm_flat = (~pad_mask).astype(jnp.float32).reshape(B, 1, HW)

    # Per-channel inverse frequencies (dim_t[2k] == dim_t[2k+1]) and the
    # sin/cos phase, shaped (D, 1) to broadcast along the channel (sublane)
    # axis inside the kernel.
    i = jnp.arange(D)
    dim_t = (temperature ** (2 * (i // 2) / D)).astype(jnp.float32)
    inv_dim_t = (1.0 / dim_t).reshape(D, 1)
    phase = ((i % 2).astype(jnp.float32) * (np.pi / 2)).reshape(D, 1)

    # Fused constant matrix: (1,HW) @ (HW,4HW) gives
    # [cumsum over H | cumsum over W | column-sum tiled | row-sum tiled].
    ut_h = np.triu(np.ones((H, H), np.float32))     # h' <= h
    ut_w = np.triu(np.ones((W, W), np.float32))     # w' <= w
    eye_h = np.eye(H, dtype=np.float32)
    eye_w = np.eye(W, dtype=np.float32)
    m_big = np.concatenate(
        [np.kron(ut_h, eye_w),                      # y cumsum
         np.kron(eye_h, ut_w),                      # x cumsum
         np.kron(np.ones((H, H), np.float32), eye_w),   # y denom (col sums)
         np.kron(eye_h, np.ones((W, W), np.float32))],  # x denom (row sums)
        axis=1)                                     # (HW, 4*HW)
    m_big = jnp.asarray(m_big)

    bt = _choose_batch_block(B, 2 * D * HW * 4)
    grid = (B // bt,)

    out_flat = pl.pallas_call(
        _sine_pos_kernel,
        out_shape=jax.ShapeDtypeStruct((B, 2 * D, HW), jnp.float32),
        grid_spec=pltpu.PrefetchScalarGridSpec(
            num_scalar_prefetch=0,
            grid=grid,
            in_specs=[
                pl.BlockSpec((bt, 1, HW), lambda g: (g, 0, 0)),
                pl.BlockSpec((HW, 4 * HW), lambda g: (0, 0)),
                pl.BlockSpec((D, 1), lambda g: (0, 0)),
                pl.BlockSpec((D, 1), lambda g: (0, 0)),
            ],
            out_specs=pl.BlockSpec((bt, 2 * D, HW), lambda g: (g, 0, 0)),
        ),
        compiler_params=pltpu.CompilerParams(
            dimension_semantics=("parallel",)),
    )(nm_flat, m_big, inv_dim_t, phase)

    # Contiguous reshape only (same HBM bytes as NCHW) -- no transpose pass.
    return out_flat.reshape(B, num_features, H, W)


def _reference(pad_mask, num_features):
    """Pure-JAX transcription of the PyTorch forward, for validation."""
    D = num_features // 2
    nm = (~pad_mask).astype(jnp.float32)
    y = jnp.cumsum(nm, axis=1)
    x = jnp.cumsum(nm, axis=2)
    y = y / (y[:, -1:, :] + 1e-6)
    x = x / (x[:, :, -1:] + 1e-6)
    i = jnp.arange(D)
    dim_t = (10000.0 ** (2 * (i // 2) / D)).astype(jnp.float32)
    px = x[..., None] / dim_t
    py = y[..., None] / dim_t
    B, H, W = pad_mask.shape
    ex = jnp.stack([jnp.sin(px[..., 0::2]), jnp.cos(px[..., 1::2])],
                   axis=4).reshape(B, H, W, D)
    ey = jnp.stack([jnp.sin(py[..., 0::2]), jnp.cos(py[..., 1::2])],
                   axis=4).reshape(B, H, W, D)
    return jnp.transpose(jnp.concatenate([ey, ex], axis=3), (0, 3, 1, 2))


if __name__ == "__main__":
    B, H, W = 2, 16, 16
    num_features = 32

    key = jax.random.PRNGKey(0)
    # Deterministic pad mask: True = padded. ~25% padded positions.
    pad_mask = jax.random.uniform(key, (B, H, W)) < 0.25

    out = sine_position_embedding(pad_mask, num_features)
    out = jax.block_until_ready(out)

    ref = _reference(pad_mask, num_features)
    assert out.shape == (B, num_features, H, W), out.shape
    assert out.dtype == jnp.float32, out.dtype
    if not jnp.allclose(out, ref, atol=1e-4, rtol=1e-4):
        err = float(jnp.max(jnp.abs(out - ref)))
        raise AssertionError(f"Pallas kernel mismatch vs reference, max err {err}")

    print("KERNEL_OK")
</pallas_src>

<mosaic_0001>
module attributes {stable_mosaic.version = 11 : i64} {
  func.func @_sine_pos_kernel(%arg0: i32, %arg1: memref<1x1x256xf32, #tpu.memory_space<vmem>>, %arg2: memref<256x1024xf32, #tpu.memory_space<vmem>>, %arg3: memref<16x1xf32, #tpu.memory_space<vmem>>, %arg4: memref<16x1xf32, #tpu.memory_space<vmem>>, %arg5: memref<1x32x256xf32, #tpu.memory_space<vmem>>) attributes {dimension_semantics = [#tpu.dimension_semantics<parallel>], iteration_bounds = array<i64: 2>, scalar_prefetch = 0 : i64, scratch_operands = 0 : i64, tpu.core_type = #tpu.core_type<tc>, window_params = [{transform_indices = @transform_0, window_bounds = array<i64: 1, 1, 256>}, {pipeline_mode = #tpu.pipeline_mode<synchronous>, transform_indices = @transform_1, window_bounds = array<i64: 256, 1024>}, {pipeline_mode = #tpu.pipeline_mode<synchronous>, transform_indices = @transform_2, window_bounds = array<i64: 16, 1>}, {pipeline_mode = #tpu.pipeline_mode<synchronous>, transform_indices = @transform_3, window_bounds = array<i64: 16, 1>}, {transform_indices = @transform_4, window_bounds = array<i64: 1, 32, 256>}]} {
    %c0 = arith.constant 0 : index
    %c0_0 = arith.constant 0 : index
    %0 = vector.load %arg2[%c0, %c0_0] : memref<256x1024xf32, #tpu.memory_space<vmem>>, vector<256x1024xf32>
    %c0_1 = arith.constant 0 : index
    %c0_2 = arith.constant 0 : index
    %1 = vector.load %arg3[%c0_1, %c0_2] : memref<16x1xf32, #tpu.memory_space<vmem>>, vector<16x1xf32>
    %c0_3 = arith.constant 0 : index
    %c0_4 = arith.constant 0 : index
    %2 = vector.load %arg4[%c0_3, %c0_4] : memref<16x1xf32, #tpu.memory_space<vmem>>, vector<16x1xf32>
    %c0_5 = arith.constant 0 : index
    %c0_6 = arith.constant 0 : index
    %c0_7 = arith.constant 0 : index
    %3 = vector.load %arg1[%c0_5, %c0_6, %c0_7] : memref<1x1x256xf32, #tpu.memory_space<vmem>>, vector<1x1x256xf32>
    %4 = vector.shape_cast %3 : vector<1x1x256xf32> to vector<1x256xf32>
    %cst = arith.constant dense<0.000000e+00> : vector<1x1024xf32>
    %5 = tpu.matmul %4, %0, %cst {dimension_numbers = #tpu.dot_dimension_numbers<[1], [0], [0], [1], [0, 0, 1, 1], [], []>} : vector<1x256xf32>, vector<256x1024xf32>, vector<1x1024xf32> -> vector<1x1024xf32>
    %6 = vector.extract_strided_slice %5 {offsets = [0, 0], sizes = [1, 256], strides = [1, 1]} : vector<1x1024xf32> to vector<1x256xf32>
    %7 = vector.extract_strided_slice %5 {offsets = [0, 512], sizes = [1, 256], strides = [1, 1]} : vector<1x1024xf32> to vector<1x256xf32>
    %cst_8 = arith.constant 9.99999997E-7 : f32
    %8 = vector.broadcast %cst_8 : f32 to vector<1x256xf32>
    %9 = arith.addf %7, %8 : vector<1x256xf32>
    %10 = tpu.reciprocal %9 : vector<1x256xf32> -> vector<1x256xf32>
    %11 = arith.mulf %6, %10 : vector<1x256xf32>
    %12 = vector.extract_strided_slice %5 {offsets = [0, 256], sizes = [1, 256], strides = [1, 1]} : vector<1x1024xf32> to vector<1x256xf32>
    %13 = vector.extract_strided_slice %5 {offsets = [0, 768], sizes = [1, 256], strides = [1, 1]} : vector<1x1024xf32> to vector<1x256xf32>
    %cst_9 = arith.constant 9.99999997E-7 : f32
    %14 = vector.broadcast %cst_9 : f32 to vector<1x256xf32>
    %15 = arith.addf %13, %14 : vector<1x256xf32>
    %16 = tpu.reciprocal %15 : vector<1x256xf32> -> vector<1x256xf32>
    %17 = arith.mulf %12, %16 : vector<1x256xf32>
    %18 = vector.broadcast %11 : vector<1x256xf32> to vector<16x256xf32>
    %19 = vector.broadcast %1 : vector<16x1xf32> to vector<16x256xf32>
    %20 = arith.mulf %18, %19 : vector<16x256xf32>
    %21 = vector.broadcast %2 : vector<16x1xf32> to vector<16x256xf32>
    %22 = arith.addf %20, %21 : vector<16x256xf32>
    %23 = math.sin %22 : vector<16x256xf32>
    %c0_10 = arith.constant 0 : index
    %c0_11 = arith.constant 0 : index
    %c0_12 = arith.constant 0 : index
    %24 = vector.load %arg5[%c0_10, %c0_11, %c0_12] : memref<1x32x256xf32, #tpu.memory_space<vmem>>, vector<1x16x256xf32>
    %25 = vector.shape_cast %24 : vector<1x16x256xf32> to vector<16x256xf32>
    %26 = vector.shape_cast %23 : vector<16x256xf32> to vector<1x16x256xf32>
    tpu.vector_store %arg5[%c0_10, %c0_11, %c0_12], %26 {strides = array<i32>} : memref<1x32x256xf32, #tpu.memory_space<vmem>>, vector<1x16x256xf32>,
    %27 = vector.broadcast %17 : vector<1x256xf32> to vector<16x256xf32>
    %28 = vector.broadcast %1 : vector<16x1xf32> to vector<16x256xf32>
    %29 = arith.mulf %27, %28 : vector<16x256xf32>
    %30 = vector.broadcast %2 : vector<16x1xf32> to vector<16x256xf32>
    %31 = arith.addf %29, %30 : vector<16x256xf32>
    %32 = math.sin %31 : vector<16x256xf32>
    %c0_13 = arith.constant 0 : index
    %c16 = arith.constant 16 : index
    %c0_14 = arith.constant 0 : index
    %33 = vector.load %arg5[%c0_13, %c16, %c0_14] : memref<1x32x256xf32, #tpu.memory_space<vmem>>, vector<1x16x256xf32>
    %34 = vector.shape_cast %33 : vector<1x16x256xf32> to vector<16x256xf32>
    %35 = vector.shape_cast %32 : vector<16x256xf32> to vector<1x16x256xf32>
    tpu.vector_store %arg5[%c0_13, %c16, %c0_14], %35 {strides = array<i32>} : memref<1x32x256xf32, #tpu.memory_space<vmem>>, vector<1x16x256xf32>,
    return
  }
  func.func @transform_0(%arg0: i32) -> (i32, i32, i32) {
    %c0_i32 = arith.constant 0 : i32
    %c0_i32_0 = arith.constant 0 : i32
    %c0_i32_1 = arith.constant 0 : i32
    return %arg0, %c0_i32, %c0_i32_0 : i32, i32, i32
  }
  func.func @transform_1(%arg0: i32) -> (i32, i32) {
    %c0_i32 = arith.constant 0 : i32
    %c0_i32_0 = arith.constant 0 : i32
    %c0_i32_1 = arith.constant 0 : i32
    return %c0_i32, %c0_i32_0 : i32, i32
  }
  func.func @transform_2(%arg0: i32) -> (i32, i32) {
    %c0_i32 = arith.constant 0 : i32
    %c0_i32_0 = arith.constant 0 : i32
    %c0_i32_1 = arith.constant 0 : i32
    return %c0_i32, %c0_i32_0 : i32, i32
  }
  func.func @transform_3(%arg0: i32) -> (i32, i32) {
    %c0_i32 = arith.constant 0 : i32
    %c0_i32_0 = arith.constant 0 : i32
    %c0_i32_1 = arith.constant 0 : i32
    return %c0_i32, %c0_i32_0 : i32, i32
  }
  func.func @transform_4(%arg0: i32) -> (i32, i32, i32) {
    %c0_i32 = arith.constant 0 : i32
    %c0_i32_0 = arith.constant 0 : i32
    %c0_i32_1 = arith.constant 0 : i32
    return %arg0, %c0_i32, %c0_i32_0 : i32, i32, i32
  }
}

</mosaic_0001>

<llo_original>
// kernel: sine_position_embedding.1
$region0: #{sine_position_embedding.1}
  #allocation0 [shape = 'u32[]', space=smem, size = 0x4, offset = 0x4, fixed_abs, tag = 'smem constant byte address 0x4 - core index']
  #allocation1 [shape = 'u32[72,128]{1,0:T(1,128)}', space=vmem, size = 0x9000, scoped, tag = 'internal scratch']
  %s0 = inlined_call_operand.vmem [shape: f32[2,1,256], index: 0, kind: input, shape index: {}]
  %s1 = inlined_call_operand.hbm [shape: f32[256,1024], index: 1, kind: input, shape index: {}]
  %s2 = inlined_call_operand.vmem [shape: f32[16,1], index: 2, kind: input, shape index: {}]
  %s3 = inlined_call_operand.vmem [shape: f32[16,1], index: 3, kind: input, shape index: {}]
  %s4 = inlined_call_operand.vmem [shape: f32[2,32,256], index: 4, kind: output, shape index: {}]
  %s5 = sld [smem:[#allocation0]]
  $region53: #{sine_position_embedding.1} parent=0
    _
  %s7 = ssub.s32 1, %s5
  %s8 = scalar_select 0, %s7, %s5
  $region1: #{sine_position_embedding.1} parent=0
    #allocation2 [shape = 'u8[1048576]{0}', space=vmem, size = 0x100000, scoped, tag = 'input window, operand 1, single buffered']
    #allocation3 [shape = 's32[2]{0}', space=sflag, size = 0x8, scoped, tag = 'scoped memory for sine_position_embedding.1']
    %9 = vsyncpa [#allocation3], 0
    loop: start=0, step=1, limit=4
    $region2: #{sine_position_embedding.1} parent=1 // loop_pre_header
      _
    $region3: #{sine_position_embedding.1} parent=1 // loop_header
      %s11 = sphi 0, %s15
      %p12 = scmp.ge.s32.totalorder %s11, 4
      %s21 = sphi 0, %s23
      %s24 = sphi 0, %s21
      %s25 = sphi 0, %s24
      %s41 = sphi 0, %s25
      %s45 = sphi 0, %s45
      %s47 = sphi 0, %s45
      %s48 = sphi 0, %s47
      %s62 = sphi 0, %s48
      %s66 = sphi 0, %s66
      %s68 = sphi 0, %s66
      %s69 = sphi 0, %s68
      %s83 = sphi 0, %s69
      %s87 = sphi 0, %s87
      %s89 = sphi 0, %s87
      %s90 = sphi 0, %s89
      %s104 = sphi 0, %s90
      %s110 = sphi 0, %s112
      %s113 = sphi 0, %s110
      %s114 = sphi 0, %s113
      %s130 = sphi 0, %s114
    $region4: #{sine_position_embedding.1} parent=1 // loop_header_branch
      %14 = sbr.rel (%p12) target = $region8
    $region5: #{sine_position_embedding.1} parent=1 // loop_body
      %s16 = ssub.s32 %s11, 1
      %s17 = ssub.s32 %s11, 2
      %s18 = sadd.s32 %s11, 1
      %s19 = ssub.s32 %s11, %s18
      %p20 = scmp.eq.s32.totalorder %s19, 0
      %s22 = sadd.s32 %s21, 1
      %s23 = scalar_select %p20, %s21, %s22
      %p26 = pneg %p20
      %p27 = scmp.eq.s32.totalorder %s11, 1
      %p28 = por %p26, %p27
      %p29 = scmp.ne.s32.totalorder %s21, %s24
      %p30 = scmp.eq.s32.totalorder %s11, 0
      %p31 = por %p29, %p30
      %p32 = scmp.ne.s32.totalorder %s21, %s24
      %p33 = scmp.eq.s32.totalorder %s16, 1
      %p34 = por %p32, %p33
      %p35 = scmp.ne.s32.totalorder %s24, %s25
      %p36 = scmp.eq.s32.totalorder %s16, 0
      %p37 = por %p35, %p36
      %p38 = scmp.ne.s32.totalorder %s24, %s25
      %p39 = scmp.eq.s32.totalorder %s17, 1
      %p40 = por %p38, %p39
      %p42 = scmp.ne.s32.totalorder %s25, %s41
      %p43 = scmp.eq.s32.totalorder %s17, 0
      %p44 = por %p42, %p43
      %s46 = sadd.s32 %s45, 1
      %p49 = scmp.eq.s32.totalorder %s11, 1
      %p50 = scmp.ne.s32.totalorder %s45, %s47
      %p51 = scmp.eq.s32.totalorder %s11, 0
      %p52 = por %p50, %p51
      %p53 = scmp.ne.s32.totalorder %s45, %s47
      %p54 = scmp.eq.s32.totalorder %s16, 1
      %p55 = por %p53, %p54
      %p56 = scmp.ne.s32.totalorder %s47, %s48
      %p57 = scmp.eq.s32.totalorder %s16, 0
      %p58 = por %p56, %p57
      %p59 = scmp.ne.s32.totalorder %s47, %s48
      %p60 = scmp.eq.s32.totalorder %s17, 1
      %p61 = por %p59, %p60
      %p63 = scmp.ne.s32.totalorder %s48, %s62
      %p64 = scmp.eq.s32.totalorder %s17, 0
      %p65 = por %p63, %p64
      %s67 = sadd.s32 %s66, 1
      %p70 = scmp.eq.s32.totalorder %s11, 1
      %p71 = scmp.ne.s32.totalorder %s66, %s68
      %p72 = scmp.eq.s32.totalorder %s11, 0
      %p73 = por %p71, %p72
      %p74 = scmp.ne.s32.totalorder %s66, %s68
      %p75 = scmp.eq.s32.totalorder %s16, 1
      %p76 = por %p74, %p75
      %p77 = scmp.ne.s32.totalorder %s68, %s69
      %p78 = scmp.eq.s32.totalorder %s16, 0
      %p79 = por %p77, %p78
      %p80 = scmp.ne.s32.totalorder %s68, %s69
      %p81 = scmp.eq.s32.totalorder %s17, 1
      %p82 = por %p80, %p81
      %p84 = scmp.ne.s32.totalorder %s69, %s83
      %p85 = scmp.eq.s32.totalorder %s17, 0
      %p86 = por %p84, %p85
      %s88 = sadd.s32 %s87, 1
      %p91 = scmp.eq.s32.totalorder %s11, 1
      %p92 = scmp.ne.s32.totalorder %s87, %s89
      %p93 = scmp.eq.s32.totalorder %s11, 0
      %p94 = por %p92, %p93
      %p95 = scmp.ne.s32.totalorder %s87, %s89
      %p96 = scmp.eq.s32.totalorder %s16, 1
      %p97 = por %p95, %p96
      %p98 = scmp.ne.s32.totalorder %s89, %s90
      %p99 = scmp.eq.s32.totalorder %s16, 0
      %p100 = por %p98, %p99
      %p101 = scmp.ne.s32.totalorder %s89, %s90
      %p102 = scmp.eq.s32.totalorder %s17, 1
      %p103 = por %p101, %p102
      %p105 = scmp.ne.s32.totalorder %s90, %s104
      %p106 = scmp.eq.s32.totalorder %s17, 0
      %p107 = por %p105, %p106
      %s108 = ssub.s32 %s11, %s18
      %p109 = scmp.eq.s32.totalorder %s108, 0
      %s111 = sadd.s32 %s110, 1
      %s112 = scalar_select %p109, %s110, %s111
      %p115 = pneg %p109
      %p116 = scmp.eq.s32.totalorder %s11, 1
      %p117 = por %p115, %p116
      %p118 = scmp.ne.s32.totalorder %s110, %s113
      %p119 = scmp.eq.s32.totalorder %s11, 0
      %p120 = por %p118, %p119
      %p121 = scmp.ne.s32.totalorder %s110, %s113
      %p122 = scmp.eq.s32.totalorder %s16, 1
      %p123 = por %p121, %p122
      %p124 = scmp.ne.s32.totalorder %s113, %s114
      %p125 = scmp.eq.s32.totalorder %s16, 0
      %p126 = por %p124, %p125
      %p127 = scmp.ne.s32.totalorder %s113, %s114
      %p128 = scmp.eq.s32.totalorder %s17, 1
      %p129 = por %p127, %p128
      %p131 = scmp.ne.s32.totalorder %s114, %s130
      %p132 = scmp.eq.s32.totalorder %s17, 0
      %p133 = por %p131, %p132
      %p134 = scmp.le.s32.totalorder 1, %s11
      %p135 = scmp.lt.s32.totalorder %s11, 3
      %p136 = pnand %p134, %p135
      %p137 = pneg %p136
      // Predicated region
      $region9: #{sine_position_embedding.1} parent=5 // pred_check
        _
      $region10: #{sine_position_embedding.1} parent=5 // pred_check_branch
        %139 = sbr.rel (%p136) target = $region12
      $region11: #{sine_position_embedding.1} parent=5 // pred_region
        %s140 = ssub.s32 %s11, 1
        // Predicated region
        $region13: #{sine_position_embedding.1} parent=11 // pred_check
          %p141 = pneg %p58
        $region14: #{sine_position_embedding.1} parent=11 // pred_check_branch
          %143 = sbr.rel (%p141) target = $region16
        $region15: #{sine_position_embedding.1} parent=11 // pred_region
          %145 = vsyncadd [#allocation3], 0
          %s146 = sshll.u32 %s1, 4
          %s147 = int_to_ptr.hbm [resolvable:$true] %s146
          %s148 = sshll.u32 [#allocation2], 4
          %s149 = int_to_ptr.vmem [resolvable:$true] %s148
          %154 = dma.hbm_to_vmem [thread:$0]  %s147, 32768, %s149, [#allocation3], 1024, 1024, 64
        $region16: #{sine_position_embedding.1} parent=11 // pred_fallthru
          _
        // Predicated region
        $region17: #{sine_position_embedding.1} parent=11 // pred_check
          %p155 = pneg %p79
        $region18: #{sine_position_embedding.1} parent=11 // pred_check_branch
          %157 = sbr.rel (%p155) target = $region20
        $region19: #{sine_position_embedding.1} parent=11 // pred_region
          _
        $region20: #{sine_position_embedding.1} parent=11 // pred_fallthru
          _
        // Predicated region
        $region21: #{sine_position_embedding.1} parent=11 // pred_check
          %p158 = pneg %p100
        $region22: #{sine_position_embedding.1} parent=11 // pred_check_branch
          %160 = sbr.rel (%p158) target = $region24
        $region23: #{sine_position_embedding.1} parent=11 // pred_region
          _
        $region24: #{sine_position_embedding.1} parent=11 // pred_fallthru
          _
      $region12: #{sine_position_embedding.1} parent=5 // pred_fallthru
        _
      %p161 = scmp.lt.s32.totalorder %s11, 2
      // Predicated region
      $region25: #{sine_position_embedding.1} parent=5 // pred_check
        %p162 = pneg %p161
      $region26: #{sine_position_embedding.1} parent=5 // pred_check_branch
        %164 = sbr.rel (%p162) target = $region28
      $region27: #{sine_position_embedding.1} parent=5 // pred_region
        // Predicated region
        $region29: #{sine_position_embedding.1} parent=27 // pred_check
          %p165 = pneg %p31
        $region30: #{sine_position_embedding.1} parent=27 // pred_check_branch
          %167 = sbr.rel (%p165) target = $region32
        $region31: #{sine_position_embedding.1} parent=27 // pred_region
          %p168 = scmp.lt.s32.totalorder %s11, 1
          %s169 = scalar_select %p168, %s11, 1
          %s170 = smul.addr %s169, 2
          %s171 = scalar_lea.vmem %s0, %s170
        $region32: #{sine_position_embedding.1} parent=27 // pred_fallthru
          _
      $region28: #{sine_position_embedding.1} parent=5 // pred_fallthru
        _
      %p172 = scmp.le.s32.totalorder 1, %s11
      %p173 = scmp.lt.s32.totalorder %s11, 3
      %p174 = pnand %p172, %p173
      %p175 = pneg %p174
      // Predicated region
      $region33: #{sine_position_embedding.1} parent=5 // pred_check
        _
      $region34: #{sine_position_embedding.1} parent=5 // pred_check_branch
        %177 = sbr.rel (%p174) target = $region36
      $region35: #{sine_position_embedding.1} parent=5 // pred_region
        %s178 = ssub.s32 %s11, 1
        // Predicated region
        $region37: #{sine_position_embedding.1} parent=35 // pred_check
          %p179 = pneg %p58
        $region38: #{sine_position_embedding.1} parent=35 // pred_check_branch
          %181 = sbr.rel (%p179) target = $region40
        $region39: #{sine_position_embedding.1} parent=35 // pred_region
          %183 = dma.done [#allocation3], 32768
        $region40: #{sine_position_embedding.1} parent=35 // pred_fallthru
          _
        %p184 = scmp.lt.s32.totalorder %s16, 1
        %s185 = scalar_select %p184, %s16, 1
        %s186 = smul.addr %s185, 2
        %s187 = scalar_lea.vmem %s0, %s186
        %p188 = pneg %p37
        %p189 = pneg %p34
        %p190 = pneg %p58
        %p191 = pneg %p55
        %p192 = pneg %p79
        %p193 = pneg %p76
        %p194 = pneg %p100
        %p195 = pneg %p97
        %p196 = pneg %p126
        %p197 = pneg %p123
        %p198 = scmp.lt.s32.totalorder %s16, 1
        %s199 = scalar_select %p198, %s16, 1
        %s200 = smul.addr %s199, 8
        %s201 = smul.addr %s200, 8
        %s202 = scalar_lea.vmem %s4, %s201
        %p203 = scmp.lt.s32.totalorder %s16, 1
        %s204 = scalar_select %p203, %s16, 1
        %s205 = smul.addr %s204, 2
        %s206 = scalar_lea.vmem %s0, %s205
        %p207 = scmp.lt.s32.totalorder %s16, 1
        %s208 = scalar_select %p207, %s16, 1
        %s209 = smul.addr %s208, 8
        %s210 = smul.addr %s209, 8
        %s211 = scalar_lea.vmem %s4, %s210
        %v212 = vld [vmem:[#allocation2] sm:$0xff]
        %v213 = vld [vmem:[#allocation2 + $0x8] sm:$0xff]
        %v214 = vld [vmem:[#allocation2 + $0x10] sm:$0xff]
        %v215 = vld [vmem:[#allocation2 + $0x18] sm:$0xff]
        %v216 = vld [vmem:[#allocation2 + $0x20] sm:$0xff]
        %v217 = vld [vmem:[#allocation2 + $0x28] sm:$0xff]
        %v218 = vld [vmem:[#allocation2 + $0x30] sm:$0xff]
        %v219 = vld [vmem:[#allocation2 + $0x38] sm:$0xff]
        %v220 = vld [vmem:[#allocation2 + $0x40] sm:$0xff]
        %v221 = vld [vmem:[#allocation2 + $0x48] sm:$0xff]
        %v222 = vld [vmem:[#allocation2 + $0x50] sm:$0xff]
        %v223 = vld [vmem:[#allocation2 + $0x58] sm:$0xff]
        %v224 = vld [vmem:[#allocation2 + $0x60] sm:$0xff]
        %v225 = vld [vmem:[#allocation2 + $0x68] sm:$0xff]
        %v226 = vld [vmem:[#allocation2 + $0x70] sm:$0xff]
        %v227 = vld [vmem:[#allocation2 + $0x78] sm:$0xff]
        %v228 = vld [vmem:[#allocation2 + $0x80] sm:$0xff]
        %v229 = vld [vmem:[#allocation2 + $0x88] sm:$0xff]
        %v230 = vld [vmem:[#allocation2 + $0x90] sm:$0xff]
        %v231 = vld [vmem:[#allocation2 + $0x98] sm:$0xff]
        %v232 = vld [vmem:[#allocation2 + $0xa0] sm:$0xff]
        %v233 = vld [vmem:[#allocation2 + $0xa8] sm:$0xff]
        %v234 = vld [vmem:[#allocation2 + $0xb0] sm:$0xff]
        %v235 = vld [vmem:[#allocation2 + $0xb8] sm:$0xff]
        %v236 = vld [vmem:[#allocation2 + $0xc0] sm:$0xff]
        %v237 = vld [vmem:[#allocation2 + $0xc8] sm:$0xff]
        %v238 = vld [vmem:[#allocation2 + $0xd0] sm:$0xff]
        %v239 = vld [vmem:[#allocation2 + $0xd8] sm:$0xff]
        %v240 = vld [vmem:[#allocation2 + $0xe0] sm:$0xff]
        %v241 = vld [vmem:[#allocation2 + $0xe8] sm:$0xff]
        %v242 = vld [vmem:[#allocation2 + $0xf0] sm:$0xff]
        %v243 = vld [vmem:[#allocation2 + $0xf8] sm:$0xff]
        %v244 = vld [vmem:[#allocation2 + $0x100] sm:$0xff]
        %v245 = vld [vmem:[#allocation2 + $0x108] sm:$0xff]
        %v246 = vld [vmem:[#allocation2 + $0x110] sm:$0xff]
        %v247 = vld [vmem:[#allocation2 + $0x118] sm:$0xff]
        %v248 = vld [vmem:[#allocation2 + $0x120] sm:$0xff]
        %v249 = vld [vmem:[#allocation2 + $0x128] sm:$0xff]
        %v250 = vld [vmem:[#allocation2 + $0x130] sm:$0xff]
        %v251 = vld [vmem:[#allocation2 + $0x138] sm:$0xff]
        %v252 = vld [vmem:[#allocation2 + $0x140] sm:$0xff]
        %v253 = vld [vmem:[#allocation2 + $0x148] sm:$0xff]
        %v254 = vld [vmem:[#allocation2 + $0x150] sm:$0xff]
        %v255 = vld [vmem:[#allocation2 + $0x158] sm:$0xff]
        %v256 = vld [vmem:[#allocation2 + $0x160] sm:$0xff]
        %v257 = vld [vmem:[#allocation2 + $0x168] sm:$0xff]
        %v258 = vld [vmem:[#allocation2 + $0x170] sm:$0xff]
        %v259 = vld [vmem:[#allocation2 + $0x178] sm:$0xff]
        %v260 = vld [vmem:[#allocation2 + $0x180] sm:$0xff]
        %v261 = vld [vmem:[#allocation2 + $0x188] sm:$0xff]
        %v262 = vld [vmem:[#allocation2 + $0x190] sm:$0xff]
        %v263 = vld [vmem:[#allocation2 + $0x198] sm:$0xff]
        %v264 = vld [vmem:[#allocation2 + $0x1a0] sm:$0xff]
        %v265 = vld [vmem:[#allocation2 + $0x1a8] sm:$0xff]
        %v266 = vld [vmem:[#allocation2 + $0x1b0] sm:$0xff]
        %v267 = vld [vmem:[#allocation2 + $0x1b8] sm:$0xff]
        %v268 = vld [vmem:[#allocation2 + $0x1c0] sm:$0xff]
        %v269 = vld [vmem:[#allocation2 + $0x1c8] sm:$0xff]
        %v270 = vld [vmem:[#allocation2 + $0x1d0] sm:$0xff]
        %v271 = vld [vmem:[#allocation2 + $0x1d8] sm:$0xff]
        %v272 = vld [vmem:[#allocation2 + $0x1e0] sm:$0xff]
        %v273 = vld [vmem:[#allocation2 + $0x1e8] sm:$0xff]
        %v274 = vld [vmem:[#allocation2 + $0x1f0] sm:$0xff]
        %v275 = vld [vmem:[#allocation2 + $0x1f8] sm:$0xff]
        %v276 = vld [vmem:[#allocation2 + $0x200] sm:$0xff]
        %v277 = vld [vmem:[#allocation2 + $0x208] sm:$0xff]
        %v278 = vld [vmem:[#allocation2 + $0x210] sm:$0xff]
        %v279 = vld [vmem:[#allocation2 + $0x218] sm:$0xff]
        %v280 = vld [vmem:[#allocation2 + $0x220] sm:$0xff]
        %v281 = vld [vmem:[#allocation2 + $0x228] sm:$0xff]
        %v282 = vld [vmem:[#allocation2 + $0x230] sm:$0xff]
        %v283 = vld [vmem:[#allocation2 + $0x238] sm:$0xff]
        %v284 = vld [vmem:[#allocation2 + $0x240] sm:$0xff]
        %v285 = vld [vmem:[#allocation2 + $0x248] sm:$0xff]
        %v286 = vld [vmem:[#allocation2 + $0x250] sm:$0xff]
        %v287 = vld [vmem:[#allocation2 + $0x258] sm:$0xff]
        %v288 = vld [vmem:[#allocation2 + $0x260] sm:$0xff]
        %v289 = vld [vmem:[#allocation2 + $0x268] sm:$0xff]
        %v290 = vld [vmem:[#allocation2 + $0x270] sm:$0xff]
        %v291 = vld [vmem:[#allocation2 + $0x278] sm:$0xff]
        %v292 = vld [vmem:[#allocation2 + $0x280] sm:$0xff]
        %v293 = vld [vmem:[#allocation2 + $0x288] sm:$0xff]
        %v294 = vld [vmem:[#allocation2 + $0x290] sm:$0xff]
        %v295 = vld [vmem:[#allocation2 + $0x298] sm:$0xff]
        %v296 = vld [vmem:[#allocation2 + $0x2a0] sm:$0xff]
        %v297 = vld [vmem:[#allocation2 + $0x2a8] sm:$0xff]
        %v298 = vld [vmem:[#allocation2 + $0x2b0] sm:$0xff]
        %v299 = vld [vmem:[#allocation2 + $0x2b8] sm:$0xff]
        %v300 = vld [vmem:[#allocation2 + $0x2c0] sm:$0xff]
        %v301 = vld [vmem:[#allocation2 + $0x2c8] sm:$0xff]
        %v302 = vld [vmem:[#allocation2 + $0x2d0] sm:$0xff]
        %v303 = vld [vmem:[#allocation2 + $0x2d8] sm:$0xff]
        %v304 = vld [vmem:[#allocation2 + $0x2e0] sm:$0xff]
        %v305 = vld [vmem:[#allocation2 + $0x2e8] sm:$0xff]
        %v306 = vld [vmem:[#allocation2 + $0x2f0] sm:$0xff]
        %v307 = vld [vmem:[#allocation2 + $0x2f8] sm:$0xff]
        %v308 = vld [vmem:[#allocation2 + $0x300] sm:$0xff]
        %v309 = vld [vmem:[#allocation2 + $0x308] sm:$0xff]
        %v310 = vld [vmem:[#allocation2 + $0x310] sm:$0xff]
        %v311 = vld [vmem:[#allocation2 + $0x318] sm:$0xff]
        %v312 = vld [vmem:[#allocation2 + $0x320] sm:$0xff]
        %v313 = vld [vmem:[#allocation2 + $0x328] sm:$0xff]
        %v314 = vld [vmem:[#allocation2 + $0x330] sm:$0xff]
        %v315 = vld [vmem:[#allocation2 + $0x338] sm:$0xff]
        %v316 = vld [vmem:[#allocation2 + $0x340] sm:$0xff]
        %v317 = vld [vmem:[#allocation2 + $0x348] sm:$0xff]
        %v318 = vld [vmem:[#allocation2 + $0x350] sm:$0xff]
        %v319 = vld [vmem:[#allocation2 + $0x358] sm:$0xff]
        %v320 = vld [vmem:[#allocation2 + $0x360] sm:$0xff]
        %v321 = vld [vmem:[#allocation2 + $0x368] sm:$0xff]
        %v322 = vld [vmem:[#allocation2 + $0x370] sm:$0xff]
        %v323 = vld [vmem:[#allocation2 + $0x378] sm:$0xff]
        %v324 = vld [vmem:[#allocation2 + $0x380] sm:$0xff]
        %v325 = vld [vmem:[#allocation2 + $0x388] sm:$0xff]
        %v326 = vld [vmem:[#allocation2 + $0x390] sm:$0xff]
        %v327 = vld [vmem:[#allocation2 + $0x398] sm:$0xff]
        %v328 = vld [vmem:[#allocation2 + $0x3a0] sm:$0xff]
        %v329 = vld [vmem:[#allocation2 + $0x3a8] sm:$0xff]
        %v330 = vld [vmem:[#allocation2 + $0x3b0] sm:$0xff]
        %v331 = vld [vmem:[#allocation2 + $0x3b8] sm:$0xff]
        %v332 = vld [vmem:[#allocation2 + $0x3c0] sm:$0xff]
        %v333 = vld [vmem:[#allocation2 + $0x3c8] sm:$0xff]
        %v334 = vld [vmem:[#allocation2 + $0x3d0] sm:$0xff]
        %v335 = vld [vmem:[#allocation2 + $0x3d8] sm:$0xff]
        %v336 = vld [vmem:[#allocation2 + $0x3e0] sm:$0xff]
        %v337 = vld [vmem:[#allocation2 + $0x3e8] sm:$0xff]
        %v338 = vld [vmem:[#allocation2 + $0x3f0] sm:$0xff]
        %v339 = vld [vmem:[#allocation2 + $0x3f8] sm:$0xff]
        %v340 = vld [vmem:[#allocation2 + $0x400] sm:$0xff]
        %v341 = vld [vmem:[#allocation2 + $0x408] sm:$0xff]
        %v342 = vld [vmem:[#allocation2 + $0x410] sm:$0xff]
        %v343 = vld [vmem:[#allocation2 + $0x418] sm:$0xff]
        %v344 = vld [vmem:[#allocation2 + $0x420] sm:$0xff]
        %v345 = vld [vmem:[#allocation2 + $0x428] sm:$0xff]
        %v346 = vld [vmem:[#allocation2 + $0x430] sm:$0xff]
        %v347 = vld [vmem:[#allocation2 + $0x438] sm:$0xff]
        %v348 = vld [vmem:[#allocation2 + $0x440] sm:$0xff]
        %v349 = vld [vmem:[#allocation2 + $0x448] sm:$0xff]
        %v350 = vld [vmem:[#allocation2 + $0x450] sm:$0xff]
        %v351 = vld [vmem:[#allocation2 + $0x458] sm:$0xff]
        %v352 = vld [vmem:[#allocation2 + $0x460] sm:$0xff]
        %v353 = vld [vmem:[#allocation2 + $0x468] sm:$0xff]
        %v354 = vld [vmem:[#allocation2 + $0x470] sm:$0xff]
        %v355 = vld [vmem:[#allocation2 + $0x478] sm:$0xff]
        %v356 = vld [vmem:[#allocation2 + $0x480] sm:$0xff]
        %v357 = vld [vmem:[#allocation2 + $0x488] sm:$0xff]
        %v358 = vld [vmem:[#allocation2 + $0x490] sm:$0xff]
        %v359 = vld [vmem:[#allocation2 + $0x498] sm:$0xff]
        %v360 = vld [vmem:[#allocation2 + $0x4a0] sm:$0xff]
        %v361 = vld [vmem:[#allocation2 + $0x4a8] sm:$0xff]
        %v362 = vld [vmem:[#allocation2 + $0x4b0] sm:$0xff]
        %v363 = vld [vmem:[#allocation2 + $0x4b8] sm:$0xff]
        %v364 = vld [vmem:[#allocation2 + $0x4c0] sm:$0xff]
        %v365 = vld [vmem:[#allocation2 + $0x4c8] sm:$0xff]
        %v366 = vld [vmem:[#allocation2 + $0x4d0] sm:$0xff]
        %v367 = vld [vmem:[#allocation2 + $0x4d8] sm:$0xff]
        %v368 = vld [vmem:[#allocation2 + $0x4e0] sm:$0xff]
        %v369 = vld [vmem:[#allocation2 + $0x4e8] sm:$0xff]
        %v370 = vld [vmem:[#allocation2 + $0x4f0] sm:$0xff]
        %v371 = vld [vmem:[#allocation2 + $0x4f8] sm:$0xff]
        %v372 = vld [vmem:[#allocation2 + $0x500] sm:$0xff]
        %v373 = vld [vmem:[#allocation2 + $0x508] sm:$0xff]
        %v374 = vld [vmem:[#allocation2 + $0x510] sm:$0xff]
        %v375 = vld [vmem:[#allocation2 + $0x518] sm:$0xff]
        %v376 = vld [vmem:[#allocation2 + $0x520] sm:$0xff]
        %v377 = vld [vmem:[#allocation2 + $0x528] sm:$0xff]
        %v378 = vld [vmem:[#allocation2 + $0x530] sm:$0xff]
        %v379 = vld [vmem:[#allocation2 + $0x538] sm:$0xff]
        %v380 = vld [vmem:[#allocation2 + $0x540] sm:$0xff]
        %v381 = vld [vmem:[#allocation2 + $0x548] sm:$0xff]
        %v382 = vld [vmem:[#allocation2 + $0x550] sm:$0xff]
        %v383 = vld [vmem:[#allocation2 + $0x558] sm:$0xff]
        %v384 = vld [vmem:[#allocation2 + $0x560] sm:$0xff]
        %v385 = vld [vmem:[#allocation2 + $0x568] sm:$0xff]
        %v386 = vld [vmem:[#allocation2 + $0x570] sm:$0xff]
        %v387 = vld [vmem:[#allocation2 + $0x578] sm:$0xff]
        %v388 = vld [vmem:[#allocation2 + $0x580] sm:$0xff]
        %v389 = vld [vmem:[#allocation2 + $0x588] sm:$0xff]
        %v390 = vld [vmem:[#allocation2 + $0x590] sm:$0xff]
        %v391 = vld [vmem:[#allocation2 + $0x598] sm:$0xff]
        %v392 = vld [vmem:[#allocation2 + $0x5a0] sm:$0xff]
        %v393 = vld [vmem:[#allocation2 + $0x5a8] sm:$0xff]
        %v394 = vld [vmem:[#allocation2 + $0x5b0] sm:$0xff]
        %v395 = vld [vmem:[#allocation2 + $0x5b8] sm:$0xff]
        %v396 = vld [vmem:[#allocation2 + $0x5c0] sm:$0xff]
        %v397 = vld [vmem:[#allocation2 + $0x5c8] sm:$0xff]
        %v398 = vld [vmem:[#allocation2 + $0x5d0] sm:$0xff]
        %v399 = vld [vmem:[#allocation2 + $0x5d8] sm:$0xff]
        %v400 = vld [vmem:[#allocation2 + $0x5e0] sm:$0xff]
        %v401 = vld [vmem:[#allocation2 + $0x5e8] sm:$0xff]
        %v402 = vld [vmem:[#allocation2 + $0x5f0] sm:$0xff]
        %v403 = vld [vmem:[#allocation2 + $0x5f8] sm:$0xff]
        %v404 = vld [vmem:[#allocation2 + $0x600] sm:$0xff]
        %v405 = vld [vmem:[#allocation2 + $0x608] sm:$0xff]
        %v406 = vld [vmem:[#allocation2 + $0x610] sm:$0xff]
        %v407 = vld [vmem:[#allocation2 + $0x618] sm:$0xff]
        %v408 = vld [vmem:[#allocation2 + $0x620] sm:$0xff]
        %v409 = vld [vmem:[#allocation2 + $0x628] sm:$0xff]
        %v410 = vld [vmem:[#allocation2 + $0x630] sm:$0xff]
        %v411 = vld [vmem:[#allocation2 + $0x638] sm:$0xff]
        %v412 = vld [vmem:[#allocation2 + $0x640] sm:$0xff]
        %v413 = vld [vmem:[#allocation2 + $0x648] sm:$0xff]
        %v414 = vld [vmem:[#allocation2 + $0x650] sm:$0xff]
        %v415 = vld [vmem:[#allocation2 + $0x658] sm:$0xff]
        %v416 = vld [vmem:[#allocation2 + $0x660] sm:$0xff]
        %v417 = vld [vmem:[#allocation2 + $0x668] sm:$0xff]
        %v418 = vld [vmem:[#allocation2 + $0x670] sm:$0xff]
        %v419 = vld [vmem:[#allocation2 + $0x678] sm:$0xff]
        %v420 = vld [vmem:[#allocation2 + $0x680] sm:$0xff]
        %v421 = vld [vmem:[#allocation2 + $0x688] sm:$0xff]
        %v422 = vld [vmem:[#allocation2 + $0x690] sm:$0xff]
        %v423 = vld [vmem:[#allocation2 + $0x698] sm:$0xff]
        %v424 = vld [vmem:[#allocation2 + $0x6a0] sm:$0xff]
        %v425 = vld [vmem:[#allocation2 + $0x6a8] sm:$0xff]
        %v426 = vld [vmem:[#allocation2 + $0x6b0] sm:$0xff]
        %v427 = vld [vmem:[#allocation2 + $0x6b8] sm:$0xff]
        %v428 = vld [vmem:[#allocation2 + $0x6c0] sm:$0xff]
        %v429 = vld [vmem:[#allocation2 + $0x6c8] sm:$0xff]
        %v430 = vld [vmem:[#allocation2 + $0x6d0] sm:$0xff]
        %v431 = vld [vmem:[#allocation2 + $0x6d8] sm:$0xff]
        %v432 = vld [vmem:[#allocation2 + $0x6e0] sm:$0xff]
        %v433 = vld [vmem:[#allocation2 + $0x6e8] sm:$0xff]
        %v434 = vld [vmem:[#allocation2 + $0x6f0] sm:$0xff]
        %v435 = vld [vmem:[#allocation2 + $0x6f8] sm:$0xff]
        %v436 = vld [vmem:[#allocation2 + $0x700] sm:$0xff]
        %v437 = vld [vmem:[#allocation2 + $0x708] sm:$0xff]
        %v438 = vld [vmem:[#allocation2 + $0x710] sm:$0xff]
        %v439 = vld [vmem:[#allocation2 + $0x718] sm:$0xff]
        %v440 = vld [vmem:[#allocation2 + $0x720] sm:$0xff]
        %v441 = vld [vmem:[#allocation2 + $0x728] sm:$0xff]
        %v442 = vld [vmem:[#allocation2 + $0x730] sm:$0xff]
        %v443 = vld [vmem:[#allocation2 + $0x738] sm:$0xff]
        %v444 = vld [vmem:[#allocation2 + $0x740] sm:$0xff]
        %v445 = vld [vmem:[#allocation2 + $0x748] sm:$0xff]
        %v446 = vld [vmem:[#allocation2 + $0x750] sm:$0xff]
        %v447 = vld [vmem:[#allocation2 + $0x758] sm:$0xff]
        %v448 = vld [vmem:[#allocation2 + $0x760] sm:$0xff]
        %v449 = vld [vmem:[#allocation2 + $0x768] sm:$0xff]
        %v450 = vld [vmem:[#allocation2 + $0x770] sm:$0xff]
        %v451 = vld [vmem:[#allocation2 + $0x778] sm:$0xff]
        %v452 = vld [vmem:[#allocation2 + $0x780] sm:$0xff]
        %v453 = vld [vmem:[#allocation2 + $0x788] sm:$0xff]
        %v454 = vld [vmem:[#allocation2 + $0x790] sm:$0xff]
        %v455 = vld [vmem:[#allocation2 + $0x798] sm:$0xff]
        %v456 = vld [vmem:[#allocation2 + $0x7a0] sm:$0xff]
        %v457 = vld [vmem:[#allocation2 + $0x7a8] sm:$0xff]
        %v458 = vld [vmem:[#allocation2 + $0x7b0] sm:$0xff]
        %v459 = vld [vmem:[#allocation2 + $0x7b8] sm:$0xff]
        %v460 = vld [vmem:[#allocation2 + $0x7c0] sm:$0xff]
        %v461 = vld [vmem:[#allocation2 + $0x7c8] sm:$0xff]
        %v462 = vld [vmem:[#allocation2 + $0x7d0] sm:$0xff]
        %v463 = vld [vmem:[#allocation2 + $0x7d8] sm:$0xff]
        %v464 = vld [vmem:[#allocation2 + $0x7e0] sm:$0xff]
        %v465 = vld [vmem:[#allocation2 + $0x7e8] sm:$0xff]
        %v466 = vld [vmem:[#allocation2 + $0x7f0] sm:$0xff]
        %v467 = vld [vmem:[#allocation2 + $0x7f8] sm:$0xff]
        %v468 = vld [vmem:[%s2] sm:$0xff]
        %v469 = vld [vmem:[%s2 + $0x8] sm:$0xff]
        %v470 = vld [vmem:[%s3] sm:$0xff]
        %v471 = vld [vmem:[%s3 + $0x8] sm:$0xff]
        %v472 = vld [vmem:[%s206] sm:$0x3]
        %v474 = vperm.slane %v472, 0
        %v475 = vperm.slane %v472, 1
        %478 = vmatpush.msra.mxu0 %v332
        %479 = vmatpush.msra.mxu0 %v324
        %480 = vmatpush.msra.mxu0 %v316
        %481 = vmatpush.msra.mxu0 %v308
        %482 = vmatpush.msra.mxu0 %v300
        %483 = vmatpush.msra.mxu0 %v292
        %484 = vmatpush.msra.mxu0 %v284
        %485 = vmatpush.msra.mxu0 %v276
        %486 = vmatpush.msra.mxu0 %v268
        %487 = vmatpush.msra.mxu0 %v260
        %488 = vmatpush.msra.mxu0 %v252
        %489 = vmatpush.msra.mxu0 %v244
        %490 = vmatpush.msra.mxu0 %v236
        %491 = vmatpush.msra.mxu0 %v228
        %492 = vmatpush.msra.mxu0 %v220
        %493 = vmatpush.msra.mxu0 %v212
        %494 = vmatmul.f32.gmra.mxu0 %v474
        %v495 = vpop.f32.mrf.mxu0
        %v496 = vadd.f32 0.0, %v495
        %497 = vdwg.mxu0
        %498 = vmatpush.msra.mxu0 %v460
        %499 = vmatpush.msra.mxu0 %v452
        %500 = vmatpush.msra.mxu0 %v444
        %501 = vmatpush.msra.mxu0 %v436
        %502 = vmatpush.msra.mxu0 %v428
        %503 = vmatpush.msra.mxu0 %v420
        %504 = vmatpush.msra.mxu0 %v412
        %505 = vmatpush.msra.mxu0 %v404
        %506 = vmatpush.msra.mxu0 %v396
        %507 = vmatpush.msra.mxu0 %v388
        %508 = vmatpush.msra.mxu0 %v380
        %509 = vmatpush.msra.mxu0 %v372
        %510 = vmatpush.msra.mxu0 %v364
        %511 = vmatpush.msra.mxu0 %v356
        %512 = vmatpush.msra.mxu0 %v348
        %513 = vmatpush.msra.mxu0 %v340
        %514 = vmatmul.f32.gmra.mxu0 %v475
        %v515 = vpop.f32.mrf.mxu0
        %v516 = vadd.f32 %v496, %v515
        %517 = vdwg.mxu0
        %518 = vmatpush.msra.mxu0 %v333
        %519 = vmatpush.msra.mxu0 %v325
        %520 = vmatpush.msra.mxu0 %v317
        %521 = vmatpush.msra.mxu0 %v309
        %522 = vmatpush.msra.mxu0 %v301
        %523 = vmatpush.msra.mxu0 %v293
        %524 = vmatpush.msra.mxu0 %v285
        %525 = vmatpush.msra.mxu0 %v277
        %526 = vmatpush.msra.mxu0 %v269
        %527 = vmatpush.msra.mxu0 %v261
        %528 = vmatpush.msra.mxu0 %v253
        %529 = vmatpush.msra.mxu0 %v245
        %530 = vmatpush.msra.mxu0 %v237
        %531 = vmatpush.msra.mxu0 %v229
        %532 = vmatpush.msra.mxu0 %v221
        %533 = vmatpush.msra.mxu0 %v213
        %534 = vmatmul.f32.gmra.mxu0 %v474
        %v535 = vpop.f32.mrf.mxu0
        %v536 = vadd.f32 0.0, %v535
        %537 = vdwg.mxu0
        %538 = vmatpush.msra.mxu0 %v461
        %539 = vmatpush.msra.mxu0 %v453
        %540 = vmatpush.msra.mxu0 %v445
        %541 = vmatpush.msra.mxu0 %v437
        %542 = vmatpush.msra.mxu0 %v429
        %543 = vmatpush.msra.mxu0 %v421
        %544 = vmatpush.msra.mxu0 %v413
        %545 = vmatpush.msra.mxu0 %v405
        %546 = vmatpush.msra.mxu0 %v397
        %547 = vmatpush.msra.mxu0 %v389
        %548 = vmatpush.msra.mxu0 %v381
        %549 = vmatpush.msra.mxu0 %v373
        %550 = vmatpush.msra.mxu0 %v365
        %551 = vmatpush.msra.mxu0 %v357
        %552 = vmatpush.msra.mxu0 %v349
        %553 = vmatpush.msra.mxu0 %v341
        %554 = vmatmul.f32.gmra.mxu0 %v475
        %v555 = vpop.f32.mrf.mxu0
        %v556 = vadd.f32 %v536, %v555
        %557 = vdwg.mxu0
        %558 = vmatpush.msra.mxu0 %v334
        %559 = vmatpush.msra.mxu0 %v326
        %560 = vmatpush.msra.mxu0 %v318
        %561 = vmatpush.msra.mxu0 %v310
        %562 = vmatpush.msra.mxu0 %v302
        %563 = vmatpush.msra.mxu0 %v294
        %564 = vmatpush.msra.mxu0 %v286
        %565 = vmatpush.msra.mxu0 %v278
        %566 = vmatpush.msra.mxu0 %v270
        %567 = vmatpush.msra.mxu0 %v262
        %568 = vmatpush.msra.mxu0 %v254
        %569 = vmatpush.msra.mxu0 %v246
        %570 = vmatpush.msra.mxu0 %v238
        %571 = vmatpush.msra.mxu0 %v230
        %572 = vmatpush.msra.mxu0 %v222
        %573 = vmatpush.msra.mxu0 %v214
        %574 = vmatmul.f32.gmra.mxu0 %v474
        %v575 = vpop.f32.mrf.mxu0
        %v576 = vadd.f32 0.0, %v575
        %577 = vdwg.mxu0
        %578 = vmatpush.msra.mxu0 %v462
        %579 = vmatpush.msra.mxu0 %v454
        %580 = vmatpush.msra.mxu0 %v446
        %581 = vmatpush.msra.mxu0 %v438
        %582 = vmatpush.msra.mxu0 %v430
        %583 = vmatpush.msra.mxu0 %v422
        %584 = vmatpush.msra.mxu0 %v414
        %585 = vmatpush.msra.mxu0 %v406
        %586 = vmatpush.msra.mxu0 %v398
        %587 = vmatpush.msra.mxu0 %v390
        %588 = vmatpush.msra.mxu0 %v382
        %589 = vmatpush.msra.mxu0 %v374
        %590 = vmatpush.msra.mxu0 %v366
        %591 = vmatpush.msra.mxu0 %v358
        %592 = vmatpush.msra.mxu0 %v350
        %593 = vmatpush.msra.mxu0 %v342
        %594 = vmatmul.f32.gmra.mxu0 %v475
        %v595 = vpop.f32.mrf.mxu0
        %v596 = vadd.f32 %v576, %v595
        %597 = vdwg.mxu0
        %598 = vmatpush.msra.mxu0 %v335
        %599 = vmatpush.msra.mxu0 %v327
        %600 = vmatpush.msra.mxu0 %v319
        %601 = vmatpush.msra.mxu0 %v311
        %602 = vmatpush.msra.mxu0 %v303
        %603 = vmatpush.msra.mxu0 %v295
        %604 = vmatpush.msra.mxu0 %v287
        %605 = vmatpush.msra.mxu0 %v279
        %606 = vmatpush.msra.mxu0 %v271
        %607 = vmatpush.msra.mxu0 %v263
        %608 = vmatpush.msra.mxu0 %v255
        %609 = vmatpush.msra.mxu0 %v247
        %610 = vmatpush.msra.mxu0 %v239
        %611 = vmatpush.msra.mxu0 %v231
        %612 = vmatpush.msra.mxu0 %v223
        %613 = vmatpush.msra.mxu0 %v215
        %614 = vmatmul.f32.gmra.mxu0 %v474
        %v615 = vpop.f32.mrf.mxu0
        %v616 = vadd.f32 0.0, %v615
        %617 = vdwg.mxu0
        %618 = vmatpush.msra.mxu0 %v463
        %619 = vmatpush.msra.mxu0 %v455
        %620 = vmatpush.msra.mxu0 %v447
        %621 = vmatpush.msra.mxu0 %v439
        %622 = vmatpush.msra.mxu0 %v431
        %623 = vmatpush.msra.mxu0 %v423
        %624 = vmatpush.msra.mxu0 %v415
        %625 = vmatpush.msra.mxu0 %v407
        %626 = vmatpush.msra.mxu0 %v399
        %627 = vmatpush.msra.mxu0 %v391
        %628 = vmatpush.msra.mxu0 %v383
        %629 = vmatpush.msra.mxu0 %v375
        %630 = vmatpush.msra.mxu0 %v367
        %631 = vmatpush.msra.mxu0 %v359
        %632 = vmatpush.msra.mxu0 %v351
        %633 = vmatpush.msra.mxu0 %v343
        %634 = vmatmul.f32.gmra.mxu0 %v475
        %v635 = vpop.f32.mrf.mxu0
        %v636 = vadd.f32 %v616, %v635
        %637 = vdwg.mxu0
        %638 = vmatpush.msra.mxu0 %v336
        %639 = vmatpush.msra.mxu0 %v328
        %640 = vmatpush.msra.mxu0 %v320
        %641 = vmatpush.msra.mxu0 %v312
        %642 = vmatpush.msra.mxu0 %v304
        %643 = vmatpush.msra.mxu0 %v296
        %644 = vmatpush.msra.mxu0 %v288
        %645 = vmatpush.msra.mxu0 %v280
        %646 = vmatpush.msra.mxu0 %v272
        %647 = vmatpush.msra.mxu0 %v264
        %648 = vmatpush.msra.mxu0 %v256
        %649 = vmatpush.msra.mxu0 %v248
        %650 = vmatpush.msra.mxu0 %v240
        %651 = vmatpush.msra.mxu0 %v232
        %652 = vmatpush.msra.mxu0 %v224
        %653 = vmatpush.msra.mxu0 %v216
        %654 = vmatmul.f32.gmra.mxu0 %v474
        %v655 = vpop.f32.mrf.mxu0
        %v656 = vadd.f32 0.0, %v655
        %657 = vdwg.mxu0
        %658 = vmatpush.msra.mxu0 %v464
        %659 = vmatpush.msra.mxu0 %v456
        %660 = vmatpush.msra.mxu0 %v448
        %661 = vmatpush.msra.mxu0 %v440
        %662 = vmatpush.msra.mxu0 %v432
        %663 = vmatpush.msra.mxu0 %v424
        %664 = vmatpush.msra.mxu0 %v416
        %665 = vmatpush.msra.mxu0 %v408
        %666 = vmatpush.msra.mxu0 %v400
        %667 = vmatpush.msra.mxu0 %v392
        %668 = vmatpush.msra.mxu0 %v384
        %669 = vmatpush.msra.mxu0 %v376
        %670 = vmatpush.msra.mxu0 %v368
        %671 = vmatpush.msra.mxu0 %v360
        %672 = vmatpush.msra.mxu0 %v352
        %673 = vmatpush.msra.mxu0 %v344
        %674 = vmatmul.f32.gmra.mxu0 %v475
        %v675 = vpop.f32.mrf.mxu0
        %v676 = vadd.f32 %v656, %v675
        %677 = vdwg.mxu0
        %678 = vmatpush.msra.mxu0 %v337
        %679 = vmatpush.msra.mxu0 %v329
        %680 = vmatpush.msra.mxu0 %v321
        %681 = vmatpush.msra.mxu0 %v313
        %682 = vmatpush.msra.mxu0 %v305
        %683 = vmatpush.msra.mxu0 %v297
        %684 = vmatpush.msra.mxu0 %v289
        %685 = vmatpush.msra.mxu0 %v281
        %686 = vmatpush.msra.mxu0 %v273
        %687 = vmatpush.msra.mxu0 %v265
        %688 = vmatpush.msra.mxu0 %v257
        %689 = vmatpush.msra.mxu0 %v249
        %690 = vmatpush.msra.mxu0 %v241
        %691 = vmatpush.msra.mxu0 %v233
        %692 = vmatpush.msra.mxu0 %v225
        %693 = vmatpush.msra.mxu0 %v217
        %694 = vmatmul.f32.gmra.mxu0 %v474
        %v695 = vpop.f32.mrf.mxu0
        %v696 = vadd.f32 0.0, %v695
        %697 = vdwg.mxu0
        %698 = vmatpush.msra.mxu0 %v465
        %699 = vmatpush.msra.mxu0 %v457
        %700 = vmatpush.msra.mxu0 %v449
        %701 = vmatpush.msra.mxu0 %v441
        %702 = vmatpush.msra.mxu0 %v433
        %703 = vmatpush.msra.mxu0 %v425
        %704 = vmatpush.msra.mxu0 %v417
        %705 = vmatpush.msra.mxu0 %v409
        %706 = vmatpush.msra.mxu0 %v401
        %707 = vmatpush.msra.mxu0 %v393
        %708 = vmatpush.msra.mxu0 %v385
        %709 = vmatpush.msra.mxu0 %v377
        %710 = vmatpush.msra.mxu0 %v369
        %711 = vmatpush.msra.mxu0 %v361
        %712 = vmatpush.msra.mxu0 %v353
        %713 = vmatpush.msra.mxu0 %v345
        %714 = vmatmul.f32.gmra.mxu0 %v475
        %v715 = vpop.f32.mrf.mxu0
        %v716 = vadd.f32 %v696, %v715
        %717 = vdwg.mxu0
        %718 = vmatpush.msra.mxu0 %v338
        %719 = vmatpush.msra.mxu0 %v330
        %720 = vmatpush.msra.mxu0 %v322
        %721 = vmatpush.msra.mxu0 %v314
        %722 = vmatpush.msra.mxu0 %v306
        %723 = vmatpush.msra.mxu0 %v298
        %724 = vmatpush.msra.mxu0 %v290
        %725 = vmatpush.msra.mxu0 %v282
        %726 = vmatpush.msra.mxu0 %v274
        %727 = vmatpush.msra.mxu0 %v266
        %728 = vmatpush.msra.mxu0 %v258
        %729 = vmatpush.msra.mxu0 %v250
        %730 = vmatpush.msra.mxu0 %v242
        %731 = vmatpush.msra.mxu0 %v234
        %732 = vmatpush.msra.mxu0 %v226
        %733 = vmatpush.msra.mxu0 %v218
        %734 = vmatmul.f32.gmra.mxu0 %v474
        %v735 = vpop.f32.mrf.mxu0
        %v736 = vadd.f32 0.0, %v735
        %737 = vdwg.mxu0
        %738 = vmatpush.msra.mxu0 %v466
        %739 = vmatpush.msra.mxu0 %v458
        %740 = vmatpush.msra.mxu0 %v450
        %741 = vmatpush.msra.mxu0 %v442
        %742 = vmatpush.msra.mxu0 %v434
        %743 = vmatpush.msra.mxu0 %v426
        %744 = vmatpush.msra.mxu0 %v418
        %745 = vmatpush.msra.mxu0 %v410
        %746 = vmatpush.msra.mxu0 %v402
        %747 = vmatpush.msra.mxu0 %v394
        %748 = vmatpush.msra.mxu0 %v386
        %749 = vmatpush.msra.mxu0 %v378
        %750 = vmatpush.msra.mxu0 %v370
        %751 = vmatpush.msra.mxu0 %v362
        %752 = vmatpush.msra.mxu0 %v354
        %753 = vmatpush.msra.mxu0 %v346
        %754 = vmatmul.f32.gmra.mxu0 %v475
        %v755 = vpop.f32.mrf.mxu0
        %v756 = vadd.f32 %v736, %v755
        %757 = vdwg.mxu0
        %758 = vmatpush.msra.mxu0 %v339
        %759 = vmatpush.msra.mxu0 %v331
        %760 = vmatpush.msra.mxu0 %v323
        %761 = vmatpush.msra.mxu0 %v315
        %762 = vmatpush.msra.mxu0 %v307
        %763 = vmatpush.msra.mxu0 %v299
        %764 = vmatpush.msra.mxu0 %v291
        %765 = vmatpush.msra.mxu0 %v283
        %766 = vmatpush.msra.mxu0 %v275
        %767 = vmatpush.msra.mxu0 %v267
        %768 = vmatpush.msra.mxu0 %v259
        %769 = vmatpush.msra.mxu0 %v251
        %770 = vmatpush.msra.mxu0 %v243
        %771 = vmatpush.msra.mxu0 %v235
        %772 = vmatpush.msra.mxu0 %v227
        %773 = vmatpush.msra.mxu0 %v219
        %774 = vmatmul.f32.gmra.mxu0 %v474
        %v775 = vpop.f32.mrf.mxu0
        %v776 = vadd.f32 0.0, %v775
        %777 = vdwg.mxu0
        %778 = vmatpush.msra.mxu0 %v467
        %779 = vmatpush.msra.mxu0 %v459
        %780 = vmatpush.msra.mxu0 %v451
        %781 = vmatpush.msra.mxu0 %v443
        %782 = vmatpush.msra.mxu0 %v435
        %783 = vmatpush.msra.mxu0 %v427
        %784 = vmatpush.msra.mxu0 %v419
        %785 = vmatpush.msra.mxu0 %v411
        %786 = vmatpush.msra.mxu0 %v403
        %787 = vmatpush.msra.mxu0 %v395
        %788 = vmatpush.msra.mxu0 %v387
        %789 = vmatpush.msra.mxu0 %v379
        %790 = vmatpush.msra.mxu0 %v371
        %791 = vmatpush.msra.mxu0 %v363
        %792 = vmatpush.msra.mxu0 %v355
        %793 = vmatpush.msra.mxu0 %v347
        %794 = vmatmul.f32.gmra.mxu0 %v475
        %v795 = vpop.f32.mrf.mxu0
        %v796 = vadd.f32 %v776, %v795
        %797 = vdwg.mxu0
        %v798 = vadd.f32 %v676, 1e-06
        %v799 = vadd.f32 %v716, 1e-06
        %v800 = vrcp.pop %v798
        %v801 = vmul.f32 %v798, %v800
        %v802 = vsub.f32 1.0, %v801
        %v803 = vmul.f32 %v800, %v802
        %v804 = vadd.f32 %v800, %v803
        %vm805 = vweird.f32 %v798
        %vm806 = vweird.f32 %v800
        %vm807 = vmor %vm805, %vm806
        %v808 = vsel %vm807, %v800, %v804
        %v809 = vand.u32 2147483647, %v798
        %vm810 = vcmp.eq.f32.partialorder %v809, 8.507059e+37
        %v811 = vand.u32 %v798, 2147483648
        %v812 = vor.u32 1.1754944e-38, %v811
        %v813 = vsel %vm810, %v812, %v808
        %v814 = vrcp.pop %v799
        %v815 = vmul.f32 %v799, %v814
        %v816 = vsub.f32 1.0, %v815
        %v817 = vmul.f32 %v814, %v816
        %v818 = vadd.f32 %v814, %v817
        %vm819 = vweird.f32 %v799
        %vm820 = vweird.f32 %v814
        %vm821 = vmor %vm819, %vm820
        %v822 = vsel %vm821, %v814, %v818
        %v823 = vand.u32 2147483647, %v799
        %vm824 = vcmp.eq.f32.partialorder %v823, 8.507059e+37
        %v825 = vand.u32 %v799, 2147483648
        %v826 = vor.u32 1.1754944e-38, %v825
        %v827 = vsel %vm824, %v826, %v822
        %v828 = vmul.f32 %v516, %v813
        %v829 = vmul.f32 %v556, %v827
        %v830 = vadd.f32 %v756, 1e-06
        %v831 = vadd.f32 %v796, 1e-06
        %v832 = vrcp.pop %v830
        %v833 = vmul.f32 %v830, %v832
        %v834 = vsub.f32 1.0, %v833
        %v835 = vmul.f32 %v832, %v834
        %v836 = vadd.f32 %v832, %v835
        %vm837 = vweird.f32 %v830
        %vm838 = vweird.f32 %v832
        %vm839 = vmor %vm837, %vm838
        %v840 = vsel %vm839, %v832, %v836
        %v841 = vand.u32 2147483647, %v830
        %vm842 = vcmp.eq.f32.partialorder %v841, 8.507059e+37
        %v843 = vand.u32 %v830, 2147483648
        %v844 = vor.u32 1.1754944e-38, %v843
        %v845 = vsel %vm842, %v844, %v840
        %v846 = vrcp.pop %v831
        %v847 = vmul.f32 %v831, %v846
        %v848 = vsub.f32 1.0, %v847
        %v849 = vmul.f32 %v846, %v848
        %v850 = vadd.f32 %v846, %v849
        %vm851 = vweird.f32 %v831
        %vm852 = vweird.f32 %v846
        %vm853 = vmor %vm851, %vm852
        %v854 = vsel %vm853, %v846, %v850
        %v855 = vand.u32 2147483647, %v831
        %vm856 = vcmp.eq.f32.partialorder %v855, 8.507059e+37
        %v857 = vand.u32 %v831, 2147483648
        %v858 = vor.u32 1.1754944e-38, %v857
        %v859 = vsel %vm856, %v858, %v854
        %v860 = vmul.f32 %v596, %v845
        %v861 = vmul.f32 %v636, %v859
        %v862 = vperm.slane %v828, 0
        %v863 = vperm.slane %v829, 0
        %865 = vset.pattern.permute.xlu0 0
        %866 = vperm.xlu0 %865, %v468
        %v867 = vpop.permute.xlu0 %866
        %870 = vset.pattern.permute.xlu0 0
        %871 = vperm.xlu0 %870, %v469
        %v872 = vpop.permute.xlu0 %871
        %v874 = vmul.f32 %v862, %v867
        %v875 = vmul.f32 %v863, %v867
        %v876 = vmul.f32 %v862, %v872
        %v877 = vmul.f32 %v863, %v872
        %879 = vset.pattern.permute.xlu0 0
        %880 = vperm.xlu0 %879, %v470
        %v881 = vpop.permute.xlu0 %880
        %884 = vset.pattern.permute.xlu0 0
        %885 = vperm.xlu0 %884, %v471
        %v886 = vpop.permute.xlu0 %885
        %v888 = vadd.f32 %v874, %v881
        %v889 = vadd.f32 %v875, %v881
        %v890 = vadd.f32 %v876, %v886
        %v891 = vadd.f32 %v877, %v886
        %v892 = vand.u32 2147483647, %v888
        %vm893 = vcmp.le.f32.partialorder %v892, 0.7853982
        %vm894 = vcmp.lt.s32.totalorder %v888, 0
        %v895 = vand.u32 %v888, 2139095040
        %v896 = vshrl.u32 %v895, 23
        %v897 = vsub.s32 %v896, 127
        %v898 = vand.u32 2147483647, %v888
        %v899 = vand.u32 %v898, 8388607
        %v900 = vor.u32 %v899, 8388608
        %v901 = vsub.s32 0, %v900
        %v902 = vadd.s32 %v897, 1
        %vm903 = vcmp.gt.s32.totalorder %v902, 0
        %v904 = vsel %vm903, %v902, 0
        %v905 = vshrl.u32 %v904, 5
        %v906 = vand.u32 %v904, 31
        %v907 = vsub.s32 32, %v906
        %v908 = vshrl.u32 683565275, %v907
        %v909 = vshll.u32 683565275, %v906
        %v910 = vshrl.u32 2475754826, %v907
        %v911 = vor.u32 %v909, %v910
        %v912 = vshll.u32 2475754826, %v906
        %v913 = vshrl.u32 2131351028, %v907
        %v914 = vor.u32 %v912, %v913
        %v915 = vshll.u32 2131351028, %v906
        %v916 = vshrl.u32 2102212464, %v907
        %v917 = vor.u32 %v915, %v916
        %v918 = vshll.u32 2102212464, %v906
        %v919 = vshrl.u32 920167782, %v907
        %v920 = vor.u32 %v918, %v919
        %v921 = vshll.u32 920167782, %v906
        %v922 = vshrl.u32 1326507024, %v907
        %v923 = vor.u32 %v921, %v922
        %vm924 = vcmp.lt.s32.totalorder %v905, 1
        %vm925 = vcmp.lt.s32.totalorder %v905, 2
        %vm926 = vcmp.lt.s32.totalorder %v905, 3
        %vm927 = vcmp.lt.s32.totalorder %v905, 4
        %v928 = vsel %vm924, %v908, %v911
        %v929 = vsel %vm927, %v917, 2102212464
        %v930 = vsel %vm926, %v914, %v929
        %v931 = vsel %vm925, %v928, %v930
        %v932 = vsel %vm924, %v911, %v914
        %v933 = vsel %vm927, %v920, 920167782
        %v934 = vsel %vm926, %v917, %v933
        %v935 = vsel %vm925, %v932, %v934
        %v936 = vsel %vm924, %v914, %v917
        %v937 = vsel %vm927, %v923, 1326507024
        %v938 = vsel %vm926, %v920, %v937
        %v939 = vsel %vm925, %v936, %v938
        %v940 = vshll.u32 %v900, 8
        %v941 = vand.u32 %v940, 65535
        %v942 = vshrl.u32 %v940, 16
        %v943 = vand.u32 %v939, 65535
        %v944 = vshrl.u32 %v939, 16
        %v945 = vmul.u32 %v941, %v943
        %v946 = vmul.u32 %v941, %v944
        %v947 = vmul.u32 %v942, %v943
        %v948 = vmul.u32 %v942, %v944
        %v949 = vshll.u32 %v946, 16
        %v950 = vshrl.u32 %v946, 16
        %v951 = vshll.u32 %v947, 16
        %v952 = vshrl.u32 %v947, 16
        %vm953 = vc.u32 %v945, %v949
        %v954 = vsel %vm953, 1, 0
        %v955 = vadd.s32 %v945, %v949
        %v956 = vadd.s32 %v948, %v954
        %vm957 = vc.u32 %v955, %v951
        %v958 = vsel %vm957, 1, 0
        %v959 = vadd.s32 %v955, %v951
        %v960 = vadd.s32 %v956, %v958
        %v961 = vadd.s32 %v960, %v950
        %v962 = vadd.s32 %v961, %v952
        %v963 = vand.u32 %v940, 65535
        %v964 = vshrl.u32 %v940, 16
        %v965 = vand.u32 %v935, 65535
        %v966 = vshrl.u32 %v935, 16
        %v967 = vmul.u32 %v963, %v965
        %v968 = vmul.u32 %v963, %v966
        %v969 = vmul.u32 %v964, %v965
        %v970 = vmul.u32 %v964, %v966
        %v971 = vshll.u32 %v968, 16
        %v972 = vshrl.u32 %v968, 16
        %v973 = vshll.u32 %v969, 16
        %v974 = vshrl.u32 %v969, 16
        %vm975 = vc.u32 %v967, %v971
        %v976 = vsel %vm975, 1, 0
        %v977 = vadd.s32 %v967, %v971
        %v978 = vadd.s32 %v970, %v976
        %vm979 = vc.u32 %v977, %v973
        %v980 = vsel %vm979, 1, 0
        %v981 = vadd.s32 %v977, %v973
        %v982 = vadd.s32 %v978, %v980
        %v983 = vadd.s32 %v982, %v972
        %v984 = vadd.s32 %v983, %v974
        %v985 = vmul.u32 %v940, %v931
        %v986 = vadd.s32 %v962, %v981
        %vm987 = vc.u32 %v962, %v981
        %v988 = vadd.s32 %v984, 1
        %v989 = vsel %vm987, %v988, %v984
        %v990 = vadd.s32 %v985, %v989
        %v991 = vadd.s32 %v990, 536870912
        %v992 = vshrl.u32 %v991, 30
        %v993 = vshll.u32 %v992, 30
        %v994 = vsub.s32 %v990, %v993
        %vm995 = vcmp.lt.s32.totalorder %v994, 0
        %v996 = vsub.s32 0, %v994
        %v997 = vsel %vm995, %v996, %v994
        %v998 = vclz %v997
        %v999 = vsub.s32 %v998, 2
        %vm1000 = vcmp.gt.s32.totalorder 0, %v999
        %v1001 = vsel %vm1000, 0, %v999
        %v1002 = vsub.s32 32, %v1001
        %v1003 = vshll.u32 %v994, %v1001
        %v1004 = vshrl.u32 %v986, %v1002
        %v1005 = vor.u32 %v1003, %v1004
        %v1006 = vsub.s32 4294967266, %v1001
        %v1007 = vadd.s32 %v1006, 127
        %v1008 = vshll.u32 %v1007, 23
        %v1009 = vor.u32 4788187, %v1008
        %v1010 = vand.u32 2147483647, %v1009
        %v1012 = vcvt.s32.f32 %v1005
        %v1013 = vmul.f32 %v1012, %v1010
        %v1014 = vxor.u32 %v1013, 2147483648
        %v1015 = vsel %vm894, %v1014, %v1013
        %v1016 = vsub.s32 4, %v992
        %v1017 = vsel %vm894, %v1016, %v992
        %v1018 = vsel %vm893, %v888, %v1015
        %v1019 = vsel %vm893, 0, %v1017
        %v1020 = vmul.f32 %v1018, %v1018
        %v1021 = vmul.f32 %v1020, -0.001358992
        %v1022 = vadd.f32 %v1021, 0.041655596
        %v1023 = vmul.f32 %v1020, %v1022
        %v1024 = vadd.f32 %v1023, -0.4999988
        %v1025 = vmul.f32 %v1020, %v1024
        %v1026 = vadd.f32 1.0, %v1025
        %v1027 = vmul.f32 %v1018, %v1018
        %v1028 = vmul.f32 %v1027, -0.00019511016
        %v1029 = vadd.f32 %v1028, 0.008332121
        %v1030 = vmul.f32 %v1027, %v1029
        %v1031 = vadd.f32 %v1030, -0.16666654
        %v1032 = vmul.f32 %v1027, %v1031
        %v1033 = vadd.f32 %v1032, 1.0
        %v1034 = vmul.f32 %v1033, %v1018
        %vm1035 = vweird.f32 %v888
        %v1036 = vadd.s32 %v1019, 3
        %v1037 = vand.u32 %v1036, 3
        %vm1038 = vcmp.lt.s32.totalorder %v1037, 2
        %vm1039 = vcmp.eq.s32.totalorder %v1037, 0
        %v1040 = vxor.u32 %v1034, 2147483648
        %v1041 = vsel %vm1039, %v1026, %v1040
        %vm1042 = vcmp.eq.s32.totalorder %v1037, 2
        %v1043 = vxor.u32 %v1026, 2147483648
        %v1044 = vsel %vm1042, %v1043, %v1034
        %v1045 = vsel %vm1038, %v1041, %v1044
        %v1046 = vsel %vm1035, nan, %v1045
        %v1047 = vand.u32 2147483647, %v889
        %vm1048 = vcmp.le.f32.partialorder %v1047, 0.7853982
        %vm1049 = vcmp.lt.s32.totalorder %v889, 0
        %v1050 = vand.u32 %v889, 2139095040
        %v1051 = vshrl.u32 %v1050, 23
        %v1052 = vsub.s32 %v1051, 127
        %v1053 = vand.u32 2147483647, %v889
        %v1054 = vand.u32 %v1053, 8388607
        %v1055 = vor.u32 %v1054, 8388608
        %v1056 = vsub.s32 0, %v1055
        %v1057 = vadd.s32 %v1052, 1
        %vm1058 = vcmp.gt.s32.totalorder %v1057, 0
        %v1059 = vsel %vm1058, %v1057, 0
        %v1060 = vshrl.u32 %v1059, 5
        %v1061 = vand.u32 %v1059, 31
        %v1062 = vsub.s32 32, %v1061
        %v1063 = vshrl.u32 683565275, %v1062
        %v1064 = vshll.u32 683565275, %v1061
        %v1065 = vshrl.u32 2475754826, %v1062
        %v1066 = vor.u32 %v1064, %v1065
        %v1067 = vshll.u32 2475754826, %v1061
        %v1068 = vshrl.u32 2131351028, %v1062
        %v1069 = vor.u32 %v1067, %v1068
        %v1070 = vshll.u32 2131351028, %v1061
        %v1071 = vshrl.u32 2102212464, %v1062
        %v1072 = vor.u32 %v1070, %v1071
        %v1073 = vshll.u32 2102212464, %v1061
        %v1074 = vshrl.u32 920167782, %v1062
        %v1075 = vor.u32 %v1073, %v1074
        %v1076 = vshll.u32 920167782, %v1061
        %v1077 = vshrl.u32 1326507024, %v1062
        %v1078 = vor.u32 %v1076, %v1077
        %vm1079 = vcmp.lt.s32.totalorder %v1060, 1
        %vm1080 = vcmp.lt.s32.totalorder %v1060, 2
        %vm1081 = vcmp.lt.s32.totalorder %v1060, 3
        %vm1082 = vcmp.lt.s32.totalorder %v1060, 4
        %v1083 = vsel %vm1079, %v1063, %v1066
        %v1084 = vsel %vm1082, %v1072, 2102212464
        %v1085 = vsel %vm1081, %v1069, %v1084
        %v1086 = vsel %vm1080, %v1083, %v1085
        %v1087 = vsel %vm1079, %v1066, %v1069
        %v1088 = vsel %vm1082, %v1075, 920167782
        %v1089 = vsel %vm1081, %v1072, %v1088
        %v1090 = vsel %vm1080, %v1087, %v1089
        %v1091 = vsel %vm1079, %v1069, %v1072
        %v1092 = vsel %vm1082, %v1078, 1326507024
        %v1093 = vsel %vm1081, %v1075, %v1092
        %v1094 = vsel %vm1080, %v1091, %v1093
        %v1095 = vshll.u32 %v1055, 8
        %v1096 = vand.u32 %v1095, 65535
        %v1097 = vshrl.u32 %v1095, 16
        %v1098 = vand.u32 %v1094, 65535
        %v1099 = vshrl.u32 %v1094, 16
        %v1100 = vmul.u32 %v1096, %v1098
        %v1101 = vmul.u32 %v1096, %v1099
        %v1102 = vmul.u32 %v1097, %v1098
        %v1103 = vmul.u32 %v1097, %v1099
        %v1104 = vshll.u32 %v1101, 16
        %v1105 = vshrl.u32 %v1101, 16
        %v1106 = vshll.u32 %v1102, 16
        %v1107 = vshrl.u32 %v1102, 16
        %vm1108 = vc.u32 %v1100, %v1104
        %v1109 = vsel %vm1108, 1, 0
        %v1110 = vadd.s32 %v1100, %v1104
        %v1111 = vadd.s32 %v1103, %v1109
        %vm1112 = vc.u32 %v1110, %v1106
        %v1113 = vsel %vm1112, 1, 0
        %v1114 = vadd.s32 %v1110, %v1106
        %v1115 = vadd.s32 %v1111, %v1113
        %v1116 = vadd.s32 %v1115, %v1105
        %v1117 = vadd.s32 %v1116, %v1107
        %v1118 = vand.u32 %v1095, 65535
        %v1119 = vshrl.u32 %v1095, 16
        %v1120 = vand.u32 %v1090, 65535
        %v1121 = vshrl.u32 %v1090, 16
        %v1122 = vmul.u32 %v1118, %v1120
        %v1123 = vmul.u32 %v1118, %v1121
        %v1124 = vmul.u32 %v1119, %v1120
        %v1125 = vmul.u32 %v1119, %v1121
        %v1126 = vshll.u32 %v1123, 16
        %v1127 = vshrl.u32 %v1123, 16
        %v1128 = vshll.u32 %v1124, 16
        %v1129 = vshrl.u32 %v1124, 16
        %vm1130 = vc.u32 %v1122, %v1126
        %v1131 = vsel %vm1130, 1, 0
        %v1132 = vadd.s32 %v1122, %v1126
        %v1133 = vadd.s32 %v1125, %v1131
        %vm1134 = vc.u32 %v1132, %v1128
        %v1135 = vsel %vm1134, 1, 0
        %v1136 = vadd.s32 %v1132, %v1128
        %v1137 = vadd.s32 %v1133, %v1135
        %v1138 = vadd.s32 %v1137, %v1127
        %v1139 = vadd.s32 %v1138, %v1129
        %v1140 = vmul.u32 %v1095, %v1086
        %v1141 = vadd.s32 %v1117, %v1136
        %vm1142 = vc.u32 %v1117, %v1136
        %v1143 = vadd.s32 %v1139, 1
        %v1144 = vsel %vm1142, %v1143, %v1139
        %v1145 = vadd.s32 %v1140, %v1144
        %v1146 = vadd.s32 %v1145, 536870912
        %v1147 = vshrl.u32 %v1146, 30
        %v1148 = vshll.u32 %v1147, 30
        %v1149 = vsub.s32 %v1145, %v1148
        %vm1150 = vcmp.lt.s32.totalorder %v1149, 0
        %v1151 = vsub.s32 0, %v1149
        %v1152 = vsel %vm1150, %v1151, %v1149
        %v1153 = vclz %v1152
        %v1154 = vsub.s32 %v1153, 2
        %vm1155 = vcmp.gt.s32.totalorder 0, %v1154
        %v1156 = vsel %vm1155, 0, %v1154
        %v1157 = vsub.s32 32, %v1156
        %v1158 = vshll.u32 %v1149, %v1156
        %v1159 = vshrl.u32 %v1141, %v1157
        %v1160 = vor.u32 %v1158, %v1159
        %v1161 = vsub.s32 4294967266, %v1156
        %v1162 = vadd.s32 %v1161, 127
        %v1163 = vshll.u32 %v1162, 23
        %v1164 = vor.u32 4788187, %v1163
        %v1165 = vand.u32 2147483647, %v1164
        %v1167 = vcvt.s32.f32 %v1160
        %v1168 = vmul.f32 %v1167, %v1165
        %v1169 = vxor.u32 %v1168, 2147483648
        %v1170 = vsel %vm1049, %v1169, %v1168
        %v1171 = vsub.s32 4, %v1147
        %v1172 = vsel %vm1049, %v1171, %v1147
        %v1173 = vsel %vm1048, %v889, %v1170
        %v1174 = vsel %vm1048, 0, %v1172
        %v1175 = vmul.f32 %v1173, %v1173
        %v1176 = vmul.f32 %v1175, -0.001358992
        %v1177 = vadd.f32 %v1176, 0.041655596
        %v1178 = vmul.f32 %v1175, %v1177
        %v1179 = vadd.f32 %v1178, -0.4999988
        %v1180 = vmul.f32 %v1175, %v1179
        %v1181 = vadd.f32 1.0, %v1180
        %v1182 = vmul.f32 %v1173, %v1173
        %v1183 = vmul.f32 %v1182, -0.00019511016
        %v1184 = vadd.f32 %v1183, 0.008332121
        %v1185 = vmul.f32 %v1182, %v1184
        %v1186 = vadd.f32 %v1185, -0.16666654
        %v1187 = vmul.f32 %v1182, %v1186
        %v1188 = vadd.f32 %v1187, 1.0
        %v1189 = vmul.f32 %v1188, %v1173
        %vm1190 = vweird.f32 %v889
        %v1191 = vadd.s32 %v1174, 3
        %v1192 = vand.u32 %v1191, 3
        %vm1193 = vcmp.lt.s32.totalorder %v1192, 2
        %vm1194 = vcmp.eq.s32.totalorder %v1192, 0
        %v1195 = vxor.u32 %v1189, 2147483648
        %v1196 = vsel %vm1194, %v1181, %v1195
        %vm1197 = vcmp.eq.s32.totalorder %v1192, 2
        %v1198 = vxor.u32 %v1181, 2147483648
        %v1199 = vsel %vm1197, %v1198, %v1189
        %v1200 = vsel %vm1193, %v1196, %v1199
        %v1201 = vsel %vm1190, nan, %v1200
        %v1202 = vand.u32 2147483647, %v890
        %vm1203 = vcmp.le.f32.partialorder %v1202, 0.7853982
        %vm1204 = vcmp.lt.s32.totalorder %v890, 0
        %v1205 = vand.u32 %v890, 2139095040
        %v1206 = vshrl.u32 %v1205, 23
        %v1207 = vsub.s32 %v1206, 127
        %v1208 = vand.u32 2147483647, %v890
        %v1209 = vand.u32 %v1208, 8388607
        %v1210 = vor.u32 %v1209, 8388608
        %v1211 = vsub.s32 0, %v1210
        %v1212 = vadd.s32 %v1207, 1
        %vm1213 = vcmp.gt.s32.totalorder %v1212, 0
        %v1214 = vsel %vm1213, %v1212, 0
        %v1215 = vshrl.u32 %v1214, 5
        %v1216 = vand.u32 %v1214, 31
        %v1217 = vsub.s32 32, %v1216
        %v1218 = vshrl.u32 683565275, %v1217
        %v1219 = vshll.u32 683565275, %v1216
        %v1220 = vshrl.u32 2475754826, %v1217
        %v1221 = vor.u32 %v1219, %v1220
        %v1222 = vshll.u32 2475754826, %v1216
        %v1223 = vshrl.u32 2131351028, %v1217
        %v1224 = vor.u32 %v1222, %v1223
        %v1225 = vshll.u32 2131351028, %v1216
        %v1226 = vshrl.u32 2102212464, %v1217
        %v1227 = vor.u32 %v1225, %v1226
        %v1228 = vshll.u32 2102212464, %v1216
        %v1229 = vshrl.u32 920167782, %v1217
        %v1230 = vor.u32 %v1228, %v1229
        %v1231 = vshll.u32 920167782, %v1216
        %v1232 = vshrl.u32 1326507024, %v1217
        %v1233 = vor.u32 %v1231, %v1232
        %vm1234 = vcmp.lt.s32.totalorder %v1215, 1
        %vm1235 = vcmp.lt.s32.totalorder %v1215, 2
        %vm1236 = vcmp.lt.s32.totalorder %v1215, 3
        %vm1237 = vcmp.lt.s32.totalorder %v1215, 4
        %v1238 = vsel %vm1234, %v1218, %v1221
        %v1239 = vsel %vm1237, %v1227, 2102212464
        %v1240 = vsel %vm1236, %v1224, %v1239
        %v1241 = vsel %vm1235, %v1238, %v1240
        %v1242 = vsel %vm1234, %v1221, %v1224
        %v1243 = vsel %vm1237, %v1230, 920167782
        %v1244 = vsel %vm1236, %v1227, %v1243
        %v1245 = vsel %vm1235, %v1242, %v1244
        %v1246 = vsel %vm1234, %v1224, %v1227
        %v1247 = vsel %vm1237, %v1233, 1326507024
        %v1248 = vsel %vm1236, %v1230, %v1247
        %v1249 = vsel %vm1235, %v1246, %v1248
        %v1250 = vshll.u32 %v1210, 8
        %v1251 = vand.u32 %v1250, 65535
        %v1252 = vshrl.u32 %v1250, 16
        %v1253 = vand.u32 %v1249, 65535
        %v1254 = vshrl.u32 %v1249, 16
        %v1255 = vmul.u32 %v1251, %v1253
        %v1256 = vmul.u32 %v1251, %v1254
        %v1257 = vmul.u32 %v1252, %v1253
        %v1258 = vmul.u32 %v1252, %v1254
        %v1259 = vshll.u32 %v1256, 16
        %v1260 = vshrl.u32 %v1256, 16
        %v1261 = vshll.u32 %v1257, 16
        %v1262 = vshrl.u32 %v1257, 16
        %vm1263 = vc.u32 %v1255, %v1259
        %v1264 = vsel %vm1263, 1, 0
        %v1265 = vadd.s32 %v1255, %v1259
        %v1266 = vadd.s32 %v1258, %v1264
        %vm1267 = vc.u32 %v1265, %v1261
        %v1268 = vsel %vm1267, 1, 0
        %v1269 = vadd.s32 %v1265, %v1261
        %v1270 = vadd.s32 %v1266, %v1268
        %v1271 = vadd.s32 %v1270, %v1260
        %v1272 = vadd.s32 %v1271, %v1262
        %v1273 = vand.u32 %v1250, 65535
        %v1274 = vshrl.u32 %v1250, 16
        %v1275 = vand.u32 %v1245, 65535
        %v1276 = vshrl.u32 %v1245, 16
        %v1277 = vmul.u32 %v1273, %v1275
        %v1278 = vmul.u32 %v1273, %v1276
        %v1279 = vmul.u32 %v1274, %v1275
        %v1280 = vmul.u32 %v1274, %v1276
        %v1281 = vshll.u32 %v1278, 16
        %v1282 = vshrl.u32 %v1278, 16
        %v1283 = vshll.u32 %v1279, 16
        %v1284 = vshrl.u32 %v1279, 16
        %vm1285 = vc.u32 %v1277, %v1281
        %v1286 = vsel %vm1285, 1, 0
        %v1287 = vadd.s32 %v1277, %v1281
        %v1288 = vadd.s32 %v1280, %v1286
        %vm1289 = vc.u32 %v1287, %v1283
        %v1290 = vsel %vm1289, 1, 0
        %v1291 = vadd.s32 %v1287, %v1283
        %v1292 = vadd.s32 %v1288, %v1290
        %v1293 = vadd.s32 %v1292, %v1282
        %v1294 = vadd.s32 %v1293, %v1284
        %v1295 = vmul.u32 %v1250, %v1241
        %v1296 = vadd.s32 %v1272, %v1291
        %vm1297 = vc.u32 %v1272, %v1291
        %v1298 = vadd.s32 %v1294, 1
        %v1299 = vsel %vm1297, %v1298, %v1294
        %v1300 = vadd.s32 %v1295, %v1299
        %v1301 = vadd.s32 %v1300, 536870912
        %v1302 = vshrl.u32 %v1301, 30
        %v1303 = vshll.u32 %v1302, 30
        %v1304 = vsub.s32 %v1300, %v1303
        %vm1305 = vcmp.lt.s32.totalorder %v1304, 0
        %v1306 = vsub.s32 0, %v1304
        %v1307 = vsel %vm1305, %v1306, %v1304
        %v1308 = vclz %v1307
        %v1309 = vsub.s32 %v1308, 2
        %vm1310 = vcmp.gt.s32.totalorder 0, %v1309
        %v1311 = vsel %vm1310, 0, %v1309
        %v1312 = vsub.s32 32, %v1311
        %v1313 = vshll.u32 %v1304, %v1311
        %v1314 = vshrl.u32 %v1296, %v1312
        %v1315 = vor.u32 %v1313, %v1314
        %v1316 = vsub.s32 4294967266, %v1311
        %v1317 = vadd.s32 %v1316, 127
        %v1318 = vshll.u32 %v1317, 23
        %v1319 = vor.u32 4788187, %v1318
        %v1320 = vand.u32 2147483647, %v1319
        %v1322 = vcvt.s32.f32 %v1315
        %v1323 = vmul.f32 %v1322, %v1320
        %v1324 = vxor.u32 %v1323, 2147483648
        %v1325 = vsel %vm1204, %v1324, %v1323
        %v1326 = vsub.s32 4, %v1302
        %v1327 = vsel %vm1204, %v1326, %v1302
        %v1328 = vsel %vm1203, %v890, %v1325
        %v1329 = vsel %vm1203, 0, %v1327
        %v1330 = vmul.f32 %v1328, %v1328
        %v1331 = vmul.f32 %v1330, -0.001358992
        %v1332 = vadd.f32 %v1331, 0.041655596
        %v1333 = vmul.f32 %v1330, %v1332
        %v1334 = vadd.f32 %v1333, -0.4999988
        %v1335 = vmul.f32 %v1330, %v1334
        %v1336 = vadd.f32 1.0, %v1335
        %v1337 = vmul.f32 %v1328, %v1328
        %v1338 = vmul.f32 %v1337, -0.00019511016
        %v1339 = vadd.f32 %v1338, 0.008332121
        %v1340 = vmul.f32 %v1337, %v1339
        %v1341 = vadd.f32 %v1340, -0.16666654
        %v1342 = vmul.f32 %v1337, %v1341
        %v1343 = vadd.f32 %v1342, 1.0
        %v1344 = vmul.f32 %v1343, %v1328
        %vm1345 = vweird.f32 %v890
        %v1346 = vadd.s32 %v1329, 3
        %v1347 = vand.u32 %v1346, 3
        %vm1348 = vcmp.lt.s32.totalorder %v1347, 2
        %vm1349 = vcmp.eq.s32.totalorder %v1347, 0
        %v1350 = vxor.u32 %v1344, 2147483648
        %v1351 = vsel %vm1349, %v1336, %v1350
        %vm1352 = vcmp.eq.s32.totalorder %v1347, 2
        %v1353 = vxor.u32 %v1336, 2147483648
        %v1354 = vsel %vm1352, %v1353, %v1344
        %v1355 = vsel %vm1348, %v1351, %v1354
        %v1356 = vsel %vm1345, nan, %v1355
        %v1357 = vand.u32 2147483647, %v891
        %vm1358 = vcmp.le.f32.partialorder %v1357, 0.7853982
        %vm1359 = vcmp.lt.s32.totalorder %v891, 0
        %v1360 = vand.u32 %v891, 2139095040
        %v1361 = vshrl.u32 %v1360, 23
        %v1362 = vsub.s32 %v1361, 127
        %v1363 = vand.u32 2147483647, %v891
        %v1364 = vand.u32 %v1363, 8388607
        %v1365 = vor.u32 %v1364, 8388608
        %v1366 = vsub.s32 0, %v1365
        %v1367 = vadd.s32 %v1362, 1
        %vm1368 = vcmp.gt.s32.totalorder %v1367, 0
        %v1369 = vsel %vm1368, %v1367, 0
        %v1370 = vshrl.u32 %v1369, 5
        %v1371 = vand.u32 %v1369, 31
        %v1372 = vsub.s32 32, %v1371
        %v1373 = vshrl.u32 683565275, %v1372
        %v1374 = vshll.u32 683565275, %v1371
        %v1375 = vshrl.u32 2475754826, %v1372
        %v1376 = vor.u32 %v1374, %v1375
        %v1377 = vshll.u32 2475754826, %v1371
        %v1378 = vshrl.u32 2131351028, %v1372
        %v1379 = vor.u32 %v1377, %v1378
        %v1380 = vshll.u32 2131351028, %v1371
        %v1381 = vshrl.u32 2102212464, %v1372
        %v1382 = vor.u32 %v1380, %v1381
        %v1383 = vshll.u32 2102212464, %v1371
        %v1384 = vshrl.u32 920167782, %v1372
        %v1385 = vor.u32 %v1383, %v1384
        %v1386 = vshll.u32 920167782, %v1371
        %v1387 = vshrl.u32 1326507024, %v1372
        %v1388 = vor.u32 %v1386, %v1387
        %vm1389 = vcmp.lt.s32.totalorder %v1370, 1
        %vm1390 = vcmp.lt.s32.totalorder %v1370, 2
        %vm1391 = vcmp.lt.s32.totalorder %v1370, 3
        %vm1392 = vcmp.lt.s32.totalorder %v1370, 4
        %v1393 = vsel %vm1389, %v1373, %v1376
        %v1394 = vsel %vm1392, %v1382, 2102212464
        %v1395 = vsel %vm1391, %v1379, %v1394
        %v1396 = vsel %vm1390, %v1393, %v1395
        %v1397 = vsel %vm1389, %v1376, %v1379
        %v1398 = vsel %vm1392, %v1385, 920167782
        %v1399 = vsel %vm1391, %v1382, %v1398
        %v1400 = vsel %vm1390, %v1397, %v1399
        %v1401 = vsel %vm1389, %v1379, %v1382
        %v1402 = vsel %vm1392, %v1388, 1326507024
        %v1403 = vsel %vm1391, %v1385, %v1402
        %v1404 = vsel %vm1390, %v1401, %v1403
        %v1405 = vshll.u32 %v1365, 8
        %v1406 = vand.u32 %v1405, 65535
        %v1407 = vshrl.u32 %v1405, 16
        %v1408 = vand.u32 %v1404, 65535
        %v1409 = vshrl.u32 %v1404, 16
        %v1410 = vmul.u32 %v1406, %v1408
        %v1411 = vmul.u32 %v1406, %v1409
        %v1412 = vmul.u32 %v1407, %v1408
        %v1413 = vmul.u32 %v1407, %v1409
        %v1414 = vshll.u32 %v1411, 16
        %v1415 = vshrl.u32 %v1411, 16
        %v1416 = vshll.u32 %v1412, 16
        %v1417 = vshrl.u32 %v1412, 16
        %vm1418 = vc.u32 %v1410, %v1414
        %v1419 = vsel %vm1418, 1, 0
        %v1420 = vadd.s32 %v1410, %v1414
        %v1421 = vadd.s32 %v1413, %v1419
        %vm1422 = vc.u32 %v1420, %v1416
        %v1423 = vsel %vm1422, 1, 0
        %v1424 = vadd.s32 %v1420, %v1416
        %v1425 = vadd.s32 %v1421, %v1423
        %v1426 = vadd.s32 %v1425, %v1415
        %v1427 = vadd.s32 %v1426, %v1417
        %v1428 = vand.u32 %v1405, 65535
        %v1429 = vshrl.u32 %v1405, 16
        %v1430 = vand.u32 %v1400, 65535
        %v1431 = vshrl.u32 %v1400, 16
        %v1432 = vmul.u32 %v1428, %v1430
        %v1433 = vmul.u32 %v1428, %v1431
        %v1434 = vmul.u32 %v1429, %v1430
        %v1435 = vmul.u32 %v1429, %v1431
        %v1436 = vshll.u32 %v1433, 16
        %v1437 = vshrl.u32 %v1433, 16
        %v1438 = vshll.u32 %v1434, 16
        %v1439 = vshrl.u32 %v1434, 16
        %vm1440 = vc.u32 %v1432, %v1436
        %v1441 = vsel %vm1440, 1, 0
        %v1442 = vadd.s32 %v1432, %v1436
        %v1443 = vadd.s32 %v1435, %v1441
        %vm1444 = vc.u32 %v1442, %v1438
        %v1445 = vsel %vm1444, 1, 0
        %v1446 = vadd.s32 %v1442, %v1438
        %v1447 = vadd.s32 %v1443, %v1445
        %v1448 = vadd.s32 %v1447, %v1437
        %v1449 = vadd.s32 %v1448, %v1439
        %v1450 = vmul.u32 %v1405, %v1396
        %v1451 = vadd.s32 %v1427, %v1446
        %vm1452 = vc.u32 %v1427, %v1446
        %v1453 = vadd.s32 %v1449, 1
        %v1454 = vsel %vm1452, %v1453, %v1449
        %v1455 = vadd.s32 %v1450, %v1454
        %v1456 = vadd.s32 %v1455, 536870912
        %v1457 = vshrl.u32 %v1456, 30
        %v1458 = vshll.u32 %v1457, 30
        %v1459 = vsub.s32 %v1455, %v1458
        %vm1460 = vcmp.lt.s32.totalorder %v1459, 0
        %v1461 = vsub.s32 0, %v1459
        %v1462 = vsel %vm1460, %v1461, %v1459
        %v1463 = vclz %v1462
        %v1464 = vsub.s32 %v1463, 2
        %vm1465 = vcmp.gt.s32.totalorder 0, %v1464
        %v1466 = vsel %vm1465, 0, %v1464
        %v1467 = vsub.s32 32, %v1466
        %v1468 = vshll.u32 %v1459, %v1466
        %v1469 = vshrl.u32 %v1451, %v1467
        %v1470 = vor.u32 %v1468, %v1469
        %v1471 = vsub.s32 4294967266, %v1466
        %v1472 = vadd.s32 %v1471, 127
        %v1473 = vshll.u32 %v1472, 23
        %v1474 = vor.u32 4788187, %v1473
        %v1475 = vand.u32 2147483647, %v1474
        %v1477 = vcvt.s32.f32 %v1470
        %v1478 = vmul.f32 %v1477, %v1475
        %v1479 = vxor.u32 %v1478, 2147483648
        %v1480 = vsel %vm1359, %v1479, %v1478
        %v1481 = vsub.s32 4, %v1457
        %v1482 = vsel %vm1359, %v1481, %v1457
        %v1483 = vsel %vm1358, %v891, %v1480
        %v1484 = vsel %vm1358, 0, %v1482
        %v1485 = vmul.f32 %v1483, %v1483
        %v1486 = vmul.f32 %v1485, -0.001358992
        %v1487 = vadd.f32 %v1486, 0.041655596
        %v1488 = vmul.f32 %v1485, %v1487
        %v1489 = vadd.f32 %v1488, -0.4999988
        %v1490 = vmul.f32 %v1485, %v1489
        %v1491 = vadd.f32 1.0, %v1490
        %v1492 = vmul.f32 %v1483, %v1483
        %v1493 = vmul.f32 %v1492, -0.00019511016
        %v1494 = vadd.f32 %v1493, 0.008332121
        %v1495 = vmul.f32 %v1492, %v1494
        %v1496 = vadd.f32 %v1495, -0.16666654
        %v1497 = vmul.f32 %v1492, %v1496
        %v1498 = vadd.f32 %v1497, 1.0
        %v1499 = vmul.f32 %v1498, %v1483
        %vm1500 = vweird.f32 %v891
        %v1501 = vadd.s32 %v1484, 3
        %v1502 = vand.u32 %v1501, 3
        %vm1503 = vcmp.lt.s32.totalorder %v1502, 2
        %vm1504 = vcmp.eq.s32.totalorder %v1502, 0
        %v1505 = vxor.u32 %v1499, 2147483648
        %v1506 = vsel %vm1504, %v1491, %v1505
        %vm1507 = vcmp.eq.s32.totalorder %v1502, 2
        %v1508 = vxor.u32 %v1491, 2147483648
        %v1509 = vsel %vm1507, %v1508, %v1499
        %v1510 = vsel %vm1503, %v1506, %v1509
        %v1511 = vsel %vm1500, nan, %v1510
        %1512 = vst [vmem:[%s211] sm:$0xff] %v1046
        %1513 = vst [vmem:[%s211 + $0x8] sm:$0xff] %v1201
        %1514 = vst [vmem:[%s211 + $0x10] sm:$0xff] %v1356
        %1515 = vst [vmem:[%s211 + $0x18] sm:$0xff] %v1511
        %v1516 = vperm.slane %v860, 0
        %v1517 = vperm.slane %v861, 0
        %v1518 = vmul.f32 %v1516, %v867
        %v1519 = vmul.f32 %v1517, %v867
        %v1520 = vmul.f32 %v1516, %v872
        %v1521 = vmul.f32 %v1517, %v872
        %v1522 = vadd.f32 %v1518, %v881
        %v1523 = vadd.f32 %v1519, %v881
        %v1524 = vadd.f32 %v1520, %v886
        %v1525 = vadd.f32 %v1521, %v886
        %v1526 = vand.u32 2147483647, %v1522
        %vm1527 = vcmp.le.f32.partialorder %v1526, 0.7853982
        %vm1528 = vcmp.lt.s32.totalorder %v1522, 0
        %v1529 = vand.u32 %v1522, 2139095040
        %v1530 = vshrl.u32 %v1529, 23
        %v1531 = vsub.s32 %v1530, 127
        %v1532 = vand.u32 2147483647, %v1522
        %v1533 = vand.u32 %v1532, 8388607
        %v1534 = vor.u32 %v1533, 8388608
        %v1535 = vsub.s32 0, %v1534
        %v1536 = vadd.s32 %v1531, 1
        %vm1537 = vcmp.gt.s32.totalorder %v1536, 0
        %v1538 = vsel %vm1537, %v1536, 0
        %v1539 = vshrl.u32 %v1538, 5
        %v1540 = vand.u32 %v1538, 31
        %v1541 = vsub.s32 32, %v1540
        %v1542 = vshrl.u32 683565275, %v1541
        %v1543 = vshll.u32 683565275, %v1540
        %v1544 = vshrl.u32 2475754826, %v1541
        %v1545 = vor.u32 %v1543, %v1544
        %v1546 = vshll.u32 2475754826, %v1540
        %v1547 = vshrl.u32 2131351028, %v1541
        %v1548 = vor.u32 %v1546, %v1547
        %v1549 = vshll.u32 2131351028, %v1540
        %v1550 = vshrl.u32 2102212464, %v1541
        %v1551 = vor.u32 %v1549, %v1550
        %v1552 = vshll.u32 2102212464, %v1540
        %v1553 = vshrl.u32 920167782, %v1541
        %v1554 = vor.u32 %v1552, %v1553
        %v1555 = vshll.u32 920167782, %v1540
        %v1556 = vshrl.u32 1326507024, %v1541
        %v1557 = vor.u32 %v1555, %v1556
        %vm1558 = vcmp.lt.s32.totalorder %v1539, 1
        %vm1559 = vcmp.lt.s32.totalorder %v1539, 2
        %vm1560 = vcmp.lt.s32.totalorder %v1539, 3
        %vm1561 = vcmp.lt.s32.totalorder %v1539, 4
        %v1562 = vsel %vm1558, %v1542, %v1545
        %v1563 = vsel %vm1561, %v1551, 2102212464
        %v1564 = vsel %vm1560, %v1548, %v1563
        %v1565 = vsel %vm1559, %v1562, %v1564
        %v1566 = vsel %vm1558, %v1545, %v1548
        %v1567 = vsel %vm1561, %v1554, 920167782
        %v1568 = vsel %vm1560, %v1551, %v1567
        %v1569 = vsel %vm1559, %v1566, %v1568
        %v1570 = vsel %vm1558, %v1548, %v1551
        %v1571 = vsel %vm1561, %v1557, 1326507024
        %v1572 = vsel %vm1560, %v1554, %v1571
        %v1573 = vsel %vm1559, %v1570, %v1572
        %v1574 = vshll.u32 %v1534, 8
        %v1575 = vand.u32 %v1574, 65535
        %v1576 = vshrl.u32 %v1574, 16
        %v1577 = vand.u32 %v1573, 65535
        %v1578 = vshrl.u32 %v1573, 16
        %v1579 = vmul.u32 %v1575, %v1577
        %v1580 = vmul.u32 %v1575, %v1578
        %v1581 = vmul.u32 %v1576, %v1577
        %v1582 = vmul.u32 %v1576, %v1578
        %v1583 = vshll.u32 %v1580, 16
        %v1584 = vshrl.u32 %v1580, 16
        %v1585 = vshll.u32 %v1581, 16
        %v1586 = vshrl.u32 %v1581, 16
        %vm1587 = vc.u32 %v1579, %v1583
        %v1588 = vsel %vm1587, 1, 0
        %v1589 = vadd.s32 %v1579, %v1583
        %v1590 = vadd.s32 %v1582, %v1588
        %vm1591 = vc.u32 %v1589, %v1585
        %v1592 = vsel %vm1591, 1, 0
        %v1593 = vadd.s32 %v1589, %v1585
        %v1594 = vadd.s32 %v1590, %v1592
        %v1595 = vadd.s32 %v1594, %v1584
        %v1596 = vadd.s32 %v1595, %v1586
        %v1597 = vand.u32 %v1574, 65535
        %v1598 = vshrl.u32 %v1574, 16
        %v1599 = vand.u32 %v1569, 65535
        %v1600 = vshrl.u32 %v1569, 16
        %v1601 = vmul.u32 %v1597, %v1599
        %v1602 = vmul.u32 %v1597, %v1600
        %v1603 = vmul.u32 %v1598, %v1599
        %v1604 = vmul.u32 %v1598, %v1600
        %v1605 = vshll.u32 %v1602, 16
        %v1606 = vshrl.u32 %v1602, 16
        %v1607 = vshll.u32 %v1603, 16
        %v1608 = vshrl.u32 %v1603, 16
        %vm1609 = vc.u32 %v1601, %v1605
        %v1610 = vsel %vm1609, 1, 0
        %v1611 = vadd.s32 %v1601, %v1605
        %v1612 = vadd.s32 %v1604, %v1610
        %vm1613 = vc.u32 %v1611, %v1607
        %v1614 = vsel %vm1613, 1, 0
        %v1615 = vadd.s32 %v1611, %v1607
        %v1616 = vadd.s32 %v1612, %v1614
        %v1617 = vadd.s32 %v1616, %v1606
        %v1618 = vadd.s32 %v1617, %v1608
        %v1619 = vmul.u32 %v1574, %v1565
        %v1620 = vadd.s32 %v1596, %v1615
        %vm1621 = vc.u32 %v1596, %v1615
        %v1622 = vadd.s32 %v1618, 1
        %v1623 = vsel %vm1621, %v1622, %v1618
        %v1624 = vadd.s32 %v1619, %v1623
        %v1625 = vadd.s32 %v1624, 536870912
        %v1626 = vshrl.u32 %v1625, 30
        %v1627 = vshll.u32 %v1626, 30
        %v1628 = vsub.s32 %v1624, %v1627
        %vm1629 = vcmp.lt.s32.totalorder %v1628, 0
        %v1630 = vsub.s32 0, %v1628
        %v1631 = vsel %vm1629, %v1630, %v1628
        %v1632 = vclz %v1631
        %v1633 = vsub.s32 %v1632, 2
        %vm1634 = vcmp.gt.s32.totalorder 0, %v1633
        %v1635 = vsel %vm1634, 0, %v1633
        %v1636 = vsub.s32 32, %v1635
        %v1637 = vshll.u32 %v1628, %v1635
        %v1638 = vshrl.u32 %v1620, %v1636
        %v1639 = vor.u32 %v1637, %v1638
        %v1640 = vsub.s32 4294967266, %v1635
        %v1641 = vadd.s32 %v1640, 127
        %v1642 = vshll.u32 %v1641, 23
        %v1643 = vor.u32 4788187, %v1642
        %v1644 = vand.u32 2147483647, %v1643
        %v1646 = vcvt.s32.f32 %v1639
        %v1647 = vmul.f32 %v1646, %v1644
        %v1648 = vxor.u32 %v1647, 2147483648
        %v1649 = vsel %vm1528, %v1648, %v1647
        %v1650 = vsub.s32 4, %v1626
        %v1651 = vsel %vm1528, %v1650, %v1626
        %v1652 = vsel %vm1527, %v1522, %v1649
        %v1653 = vsel %vm1527, 0, %v1651
        %v1654 = vmul.f32 %v1652, %v1652
        %v1655 = vmul.f32 %v1654, -0.001358992
        %v1656 = vadd.f32 %v1655, 0.041655596
        %v1657 = vmul.f32 %v1654, %v1656
        %v1658 = vadd.f32 %v1657, -0.4999988
        %v1659 = vmul.f32 %v1654, %v1658
        %v1660 = vadd.f32 1.0, %v1659
        %v1661 = vmul.f32 %v1652, %v1652
        %v1662 = vmul.f32 %v1661, -0.00019511016
        %v1663 = vadd.f32 %v1662, 0.008332121
        %v1664 = vmul.f32 %v1661, %v1663
        %v1665 = vadd.f32 %v1664, -0.16666654
        %v1666 = vmul.f32 %v1661, %v1665
        %v1667 = vadd.f32 %v1666, 1.0
        %v1668 = vmul.f32 %v1667, %v1652
        %vm1669 = vweird.f32 %v1522
        %v1670 = vadd.s32 %v1653, 3
        %v1671 = vand.u32 %v1670, 3
        %vm1672 = vcmp.lt.s32.totalorder %v1671, 2
        %vm1673 = vcmp.eq.s32.totalorder %v1671, 0
        %v1674 = vxor.u32 %v1668, 2147483648
        %v1675 = vsel %vm1673, %v1660, %v1674
        %vm1676 = vcmp.eq.s32.totalorder %v1671, 2
        %v1677 = vxor.u32 %v1660, 2147483648
        %v1678 = vsel %vm1676, %v1677, %v1668
        %v1679 = vsel %vm1672, %v1675, %v1678
        %v1680 = vsel %vm1669, nan, %v1679
        %v1681 = vand.u32 2147483647, %v1523
        %vm1682 = vcmp.le.f32.partialorder %v1681, 0.7853982
        %vm1683 = vcmp.lt.s32.totalorder %v1523, 0
        %v1684 = vand.u32 %v1523, 2139095040
        %v1685 = vshrl.u32 %v1684, 23
        %v1686 = vsub.s32 %v1685, 127
        %v1687 = vand.u32 2147483647, %v1523
        %v1688 = vand.u32 %v1687, 8388607
        %v1689 = vor.u32 %v1688, 8388608
        %v1690 = vsub.s32 0, %v1689
        %v1691 = vadd.s32 %v1686, 1
        %vm1692 = vcmp.gt.s32.totalorder %v1691, 0
        %v1693 = vsel %vm1692, %v1691, 0
        %v1694 = vshrl.u32 %v1693, 5
        %v1695 = vand.u32 %v1693, 31
        %v1696 = vsub.s32 32, %v1695
        %v1697 = vshrl.u32 683565275, %v1696
        %v1698 = vshll.u32 683565275, %v1695
        %v1699 = vshrl.u32 2475754826, %v1696
        %v1700 = vor.u32 %v1698, %v1699
        %v1701 = vshll.u32 2475754826, %v1695
        %v1702 = vshrl.u32 2131351028, %v1696
        %v1703 = vor.u32 %v1701, %v1702
        %v1704 = vshll.u32 2131351028, %v1695
        %v1705 = vshrl.u32 2102212464, %v1696
        %v1706 = vor.u32 %v1704, %v1705
        %v1707 = vshll.u32 2102212464, %v1695
        %v1708 = vshrl.u32 920167782, %v1696
        %v1709 = vor.u32 %v1707, %v1708
        %v1710 = vshll.u32 920167782, %v1695
        %v1711 = vshrl.u32 1326507024, %v1696
        %v1712 = vor.u32 %v1710, %v1711
        %vm1713 = vcmp.lt.s32.totalorder %v1694, 1
        %vm1714 = vcmp.lt.s32.totalorder %v1694, 2
        %vm1715 = vcmp.lt.s32.totalorder %v1694, 3
        %vm1716 = vcmp.lt.s32.totalorder %v1694, 4
        %v1717 = vsel %vm1713, %v1697, %v1700
        %v1718 = vsel %vm1716, %v1706, 2102212464
        %v1719 = vsel %vm1715, %v1703, %v1718
        %v1720 = vsel %vm1714, %v1717, %v1719
        %v1721 = vsel %vm1713, %v1700, %v1703
        %v1722 = vsel %vm1716, %v1709, 920167782
        %v1723 = vsel %vm1715, %v1706, %v1722
        %v1724 = vsel %vm1714, %v1721, %v1723
        %v1725 = vsel %vm1713, %v1703, %v1706
        %v1726 = vsel %vm1716, %v1712, 1326507024
        %v1727 = vsel %vm1715, %v1709, %v1726
        %v1728 = vsel %vm1714, %v1725, %v1727
        %v1729 = vshll.u32 %v1689, 8
        %v1730 = vand.u32 %v1729, 65535
        %v1731 = vshrl.u32 %v1729, 16
        %v1732 = vand.u32 %v1728, 65535
        %v1733 = vshrl.u32 %v1728, 16
        %v1734 = vmul.u32 %v1730, %v1732
        %v1735 = vmul.u32 %v1730, %v1733
        %v1736 = vmul.u32 %v1731, %v1732
        %v1737 = vmul.u32 %v1731, %v1733
        %v1738 = vshll.u32 %v1735, 16
        %v1739 = vshrl.u32 %v1735, 16
        %v1740 = vshll.u32 %v1736, 16
        %v1741 = vshrl.u32 %v1736, 16
        %vm1742 = vc.u32 %v1734, %v1738
        %v1743 = vsel %vm1742, 1, 0
        %v1744 = vadd.s32 %v1734, %v1738
        %v1745 = vadd.s32 %v1737, %v1743
        %vm1746 = vc.u32 %v1744, %v1740
        %v1747 = vsel %vm1746, 1, 0
        %v1748 = vadd.s32 %v1744, %v1740
        %v1749 = vadd.s32 %v1745, %v1747
        %v1750 = vadd.s32 %v1749, %v1739
        %v1751 = vadd.s32 %v1750, %v1741
        %v1752 = vand.u32 %v1729, 65535
        %v1753 = vshrl.u32 %v1729, 16
        %v1754 = vand.u32 %v1724, 65535
        %v1755 = vshrl.u32 %v1724, 16
        %v1756 = vmul.u32 %v1752, %v1754
        %v1757 = vmul.u32 %v1752, %v1755
        %v1758 = vmul.u32 %v1753, %v1754
        %v1759 = vmul.u32 %v1753, %v1755
        %v1760 = vshll.u32 %v1757, 16
        %v1761 = vshrl.u32 %v1757, 16
        %v1762 = vshll.u32 %v1758, 16
        %v1763 = vshrl.u32 %v1758, 16
        %vm1764 = vc.u32 %v1756, %v1760
        %v1765 = vsel %vm1764, 1, 0
        %v1766 = vadd.s32 %v1756, %v1760
        %v1767 = vadd.s32 %v1759, %v1765
        %vm1768 = vc.u32 %v1766, %v1762
        %v1769 = vsel %vm1768, 1, 0
        %v1770 = vadd.s32 %v1766, %v1762
        %v1771 = vadd.s32 %v1767, %v1769
        %v1772 = vadd.s32 %v1771, %v1761
        %v1773 = vadd.s32 %v1772, %v1763
        %v1774 = vmul.u32 %v1729, %v1720
        %v1775 = vadd.s32 %v1751, %v1770
        %vm1776 = vc.u32 %v1751, %v1770
        %v1777 = vadd.s32 %v1773, 1
        %v1778 = vsel %vm1776, %v1777, %v1773
        %v1779 = vadd.s32 %v1774, %v1778
        %v1780 = vadd.s32 %v1779, 536870912
        %v1781 = vshrl.u32 %v1780, 30
        %v1782 = vshll.u32 %v1781, 30
        %v1783 = vsub.s32 %v1779, %v1782
        %vm1784 = vcmp.lt.s32.totalorder %v1783, 0
        %v1785 = vsub.s32 0, %v1783
        %v1786 = vsel %vm1784, %v1785, %v1783
        %v1787 = vclz %v1786
        %v1788 = vsub.s32 %v1787, 2
        %vm1789 = vcmp.gt.s32.totalorder 0, %v1788
        %v1790 = vsel %vm1789, 0, %v1788
        %v1791 = vsub.s32 32, %v1790
        %v1792 = vshll.u32 %v1783, %v1790
        %v1793 = vshrl.u32 %v1775, %v1791
        %v1794 = vor.u32 %v1792, %v1793
        %v1795 = vsub.s32 4294967266, %v1790
        %v1796 = vadd.s32 %v1795, 127
        %v1797 = vshll.u32 %v1796, 23
        %v1798 = vor.u32 4788187, %v1797
        %v1799 = vand.u32 2147483647, %v1798
        %v1801 = vcvt.s32.f32 %v1794
        %v1802 = vmul.f32 %v1801, %v1799
        %v1803 = vxor.u32 %v1802, 2147483648
        %v1804 = vsel %vm1683, %v1803, %v1802
        %v1805 = vsub.s32 4, %v1781
        %v1806 = vsel %vm1683, %v1805, %v1781
        %v1807 = vsel %vm1682, %v1523, %v1804
        %v1808 = vsel %vm1682, 0, %v1806
        %v1809 = vmul.f32 %v1807, %v1807
        %v1810 = vmul.f32 %v1809, -0.001358992
        %v1811 = vadd.f32 %v1810, 0.041655596
        %v1812 = vmul.f32 %v1809, %v1811
        %v1813 = vadd.f32 %v1812, -0.4999988
        %v1814 = vmul.f32 %v1809, %v1813
        %v1815 = vadd.f32 1.0, %v1814
        %v1816 = vmul.f32 %v1807, %v1807
        %v1817 = vmul.f32 %v1816, -0.00019511016
        %v1818 = vadd.f32 %v1817, 0.008332121
        %v1819 = vmul.f32 %v1816, %v1818
        %v1820 = vadd.f32 %v1819, -0.16666654
        %v1821 = vmul.f32 %v1816, %v1820
        %v1822 = vadd.f32 %v1821, 1.0
        %v1823 = vmul.f32 %v1822, %v1807
        %vm1824 = vweird.f32 %v1523
        %v1825 = vadd.s32 %v1808, 3
        %v1826 = vand.u32 %v1825, 3
        %vm1827 = vcmp.lt.s32.totalorder %v1826, 2
        %vm1828 = vcmp.eq.s32.totalorder %v1826, 0
        %v1829 = vxor.u32 %v1823, 2147483648
        %v1830 = vsel %vm1828, %v1815, %v1829
        %vm1831 = vcmp.eq.s32.totalorder %v1826, 2
        %v1832 = vxor.u32 %v1815, 2147483648
        %v1833 = vsel %vm1831, %v1832, %v1823
        %v1834 = vsel %vm1827, %v1830, %v1833
        %v1835 = vsel %vm1824, nan, %v1834
        %v1836 = vand.u32 2147483647, %v1524
        %vm1837 = vcmp.le.f32.partialorder %v1836, 0.7853982
        %vm1838 = vcmp.lt.s32.totalorder %v1524, 0
        %v1839 = vand.u32 %v1524, 2139095040
        %v1840 = vshrl.u32 %v1839, 23
        %v1841 = vsub.s32 %v1840, 127
        %v1842 = vand.u32 2147483647, %v1524
        %v1843 = vand.u32 %v1842, 8388607
        %v1844 = vor.u32 %v1843, 8388608
        %v1845 = vsub.s32 0, %v1844
        %v1846 = vadd.s32 %v1841, 1
        %vm1847 = vcmp.gt.s32.totalorder %v1846, 0
        %v1848 = vsel %vm1847, %v1846, 0
        %v1849 = vshrl.u32 %v1848, 5
        %v1850 = vand.u32 %v1848, 31
        %v1851 = vsub.s32 32, %v1850
        %v1852 = vshrl.u32 683565275, %v1851
        %v1853 = vshll.u32 683565275, %v1850
        %v1854 = vshrl.u32 2475754826, %v1851
        %v1855 = vor.u32 %v1853, %v1854
        %v1856 = vshll.u32 2475754826, %v1850
        %v1857 = vshrl.u32 2131351028, %v1851
        %v1858 = vor.u32 %v1856, %v1857
        %v1859 = vshll.u32 2131351028, %v1850
        %v1860 = vshrl.u32 2102212464, %v1851
        %v1861 = vor.u32 %v1859, %v1860
        %v1862 = vshll.u32 2102212464, %v1850
        %v1863 = vshrl.u32 920167782, %v1851
        %v1864 = vor.u32 %v1862, %v1863
        %v1865 = vshll.u32 920167782, %v1850
        %v1866 = vshrl.u32 1326507024, %v1851
        %v1867 = vor.u32 %v1865, %v1866
        %vm1868 = vcmp.lt.s32.totalorder %v1849, 1
        %vm1869 = vcmp.lt.s32.totalorder %v1849, 2
        %vm1870 = vcmp.lt.s32.totalorder %v1849, 3
        %vm1871 = vcmp.lt.s32.totalorder %v1849, 4
        %v1872 = vsel %vm1868, %v1852, %v1855
        %v1873 = vsel %vm1871, %v1861, 2102212464
        %v1874 = vsel %vm1870, %v1858, %v1873
        %v1875 = vsel %vm1869, %v1872, %v1874
        %v1876 = vsel %vm1868, %v1855, %v1858
        %v1877 = vsel %vm1871, %v1864, 920167782
        %v1878 = vsel %vm1870, %v1861, %v1877
        %v1879 = vsel %vm1869, %v1876, %v1878
        %v1880 = vsel %vm1868, %v1858, %v1861
        %v1881 = vsel %vm1871, %v1867, 1326507024
        %v1882 = vsel %vm1870, %v1864, %v1881
        %v1883 = vsel %vm1869, %v1880, %v1882
        %v1884 = vshll.u32 %v1844, 8
        %v1885 = vand.u32 %v1884, 65535
        %v1886 = vshrl.u32 %v1884, 16
        %v1887 = vand.u32 %v1883, 65535
        %v1888 = vshrl.u32 %v1883, 16
        %v1889 = vmul.u32 %v1885, %v1887
        %v1890 = vmul.u32 %v1885, %v1888
        %v1891 = vmul.u32 %v1886, %v1887
        %v1892 = vmul.u32 %v1886, %v1888
        %v1893 = vshll.u32 %v1890, 16
        %v1894 = vshrl.u32 %v1890, 16
        %v1895 = vshll.u32 %v1891, 16
        %v1896 = vshrl.u32 %v1891, 16
        %vm1897 = vc.u32 %v1889, %v1893
        %v1898 = vsel %vm1897, 1, 0
        %v1899 = vadd.s32 %v1889, %v1893
        %v1900 = vadd.s32 %v1892, %v1898
        %vm1901 = vc.u32 %v1899, %v1895
        %v1902 = vsel %vm1901, 1, 0
        %v1903 = vadd.s32 %v1899, %v1895
        %v1904 = vadd.s32 %v1900, %v1902
        %v1905 = vadd.s32 %v1904, %v1894
        %v1906 = vadd.s32 %v1905, %v1896
        %v1907 = vand.u32 %v1884, 65535
        %v1908 = vshrl.u32 %v1884, 16
        %v1909 = vand.u32 %v1879, 65535
        %v1910 = vshrl.u32 %v1879, 16
        %v1911 = vmul.u32 %v1907, %v1909
        %v1912 = vmul.u32 %v1907, %v1910
        %v1913 = vmul.u32 %v1908, %v1909
        %v1914 = vmul.u32 %v1908, %v1910
        %v1915 = vshll.u32 %v1912, 16
        %v1916 = vshrl.u32 %v1912, 16
        %v1917 = vshll.u32 %v1913, 16
        %v1918 = vshrl.u32 %v1913, 16
        %vm1919 = vc.u32 %v1911, %v1915
        %v1920 = vsel %vm1919, 1, 0
        %v1921 = vadd.s32 %v1911, %v1915
        %v1922 = vadd.s32 %v1914, %v1920
        %vm1923 = vc.u32 %v1921, %v1917
        %v1924 = vsel %vm1923, 1, 0
        %v1925 = vadd.s32 %v1921, %v1917
        %v1926 = vadd.s32 %v1922, %v1924
        %v1927 = vadd.s32 %v1926, %v1916
        %v1928 = vadd.s32 %v1927, %v1918
        %v1929 = vmul.u32 %v1884, %v1875
        %v1930 = vadd.s32 %v1906, %v1925
        %vm1931 = vc.u32 %v1906, %v1925
        %v1932 = vadd.s32 %v1928, 1
        %v1933 = vsel %vm1931, %v1932, %v1928
        %v1934 = vadd.s32 %v1929, %v1933
        %v1935 = vadd.s32 %v1934, 536870912
        %v1936 = vshrl.u32 %v1935, 30
        %v1937 = vshll.u32 %v1936, 30
        %v1938 = vsub.s32 %v1934, %v1937
        %vm1939 = vcmp.lt.s32.totalorder %v1938, 0
        %v1940 = vsub.s32 0, %v1938
        %v1941 = vsel %vm1939, %v1940, %v1938
        %v1942 = vclz %v1941
        %v1943 = vsub.s32 %v1942, 2
        %vm1944 = vcmp.gt.s32.totalorder 0, %v1943
        %v1945 = vsel %vm1944, 0, %v1943
        %v1946 = vsub.s32 32, %v1945
        %v1947 = vshll.u32 %v1938, %v1945
        %v1948 = vshrl.u32 %v1930, %v1946
        %v1949 = vor.u32 %v1947, %v1948
        %v1950 = vsub.s32 4294967266, %v1945
        %v1951 = vadd.s32 %v1950, 127
        %v1952 = vshll.u32 %v1951, 23
        %v1953 = vor.u32 4788187, %v1952
        %v1954 = vand.u32 2147483647, %v1953
        %v1956 = vcvt.s32.f32 %v1949
        %v1957 = vmul.f32 %v1956, %v1954
        %v1958 = vxor.u32 %v1957, 2147483648
        %v1959 = vsel %vm1838, %v1958, %v1957
        %v1960 = vsub.s32 4, %v1936
        %v1961 = vsel %vm1838, %v1960, %v1936
        %v1962 = vsel %vm1837, %v1524, %v1959
        %v1963 = vsel %vm1837, 0, %v1961
        %v1964 = vmul.f32 %v1962, %v1962
        %v1965 = vmul.f32 %v1964, -0.001358992
        %v1966 = vadd.f32 %v1965, 0.041655596
        %v1967 = vmul.f32 %v1964, %v1966
        %v1968 = vadd.f32 %v1967, -0.4999988
        %v1969 = vmul.f32 %v1964, %v1968
        %v1970 = vadd.f32 1.0, %v1969
        %v1971 = vmul.f32 %v1962, %v1962
        %v1972 = vmul.f32 %v1971, -0.00019511016
        %v1973 = vadd.f32 %v1972, 0.008332121
        %v1974 = vmul.f32 %v1971, %v1973
        %v1975 = vadd.f32 %v1974, -0.16666654
        %v1976 = vmul.f32 %v1971, %v1975
        %v1977 = vadd.f32 %v1976, 1.0
        %v1978 = vmul.f32 %v1977, %v1962
        %vm1979 = vweird.f32 %v1524
        %v1980 = vadd.s32 %v1963, 3
        %v1981 = vand.u32 %v1980, 3
        %vm1982 = vcmp.lt.s32.totalorder %v1981, 2
        %vm1983 = vcmp.eq.s32.totalorder %v1981, 0
        %v1984 = vxor.u32 %v1978, 2147483648
        %v1985 = vsel %vm1983, %v1970, %v1984
        %vm1986 = vcmp.eq.s32.totalorder %v1981, 2
        %v1987 = vxor.u32 %v1970, 2147483648
        %v1988 = vsel %vm1986, %v1987, %v1978
        %v1989 = vsel %vm1982, %v1985, %v1988
        %v1990 = vsel %vm1979, nan, %v1989
        %v1991 = vand.u32 2147483647, %v1525
        %vm1992 = vcmp.le.f32.partialorder %v1991, 0.7853982
        %vm1993 = vcmp.lt.s32.totalorder %v1525, 0
        %v1994 = vand.u32 %v1525, 2139095040
        %v1995 = vshrl.u32 %v1994, 23
        %v1996 = vsub.s32 %v1995, 127
        %v1997 = vand.u32 2147483647, %v1525
        %v1998 = vand.u32 %v1997, 8388607
        %v1999 = vor.u32 %v1998, 8388608
        %v2000 = vsub.s32 0, %v1999
        %v2001 = vadd.s32 %v1996, 1
        %vm2002 = vcmp.gt.s32.totalorder %v2001, 0
        %v2003 = vsel %vm2002, %v2001, 0
        %v2004 = vshrl.u32 %v2003, 5
        %v2005 = vand.u32 %v2003, 31
        %v2006 = vsub.s32 32, %v2005
        %v2007 = vshrl.u32 683565275, %v2006
        %v2008 = vshll.u32 683565275, %v2005
        %v2009 = vshrl.u32 2475754826, %v2006
        %v2010 = vor.u32 %v2008, %v2009
        %v2011 = vshll.u32 2475754826, %v2005
        %v2012 = vshrl.u32 2131351028, %v2006
        %v2013 = vor.u32 %v2011, %v2012
        %v2014 = vshll.u32 2131351028, %v2005
        %v2015 = vshrl.u32 2102212464, %v2006
        %v2016 = vor.u32 %v2014, %v2015
        %v2017 = vshll.u32 2102212464, %v2005
        %v2018 = vshrl.u32 920167782, %v2006
        %v2019 = vor.u32 %v2017, %v2018
        %v2020 = vshll.u32 920167782, %v2005
        %v2021 = vshrl.u32 1326507024, %v2006
        %v2022 = vor.u32 %v2020, %v2021
        %vm2023 = vcmp.lt.s32.totalorder %v2004, 1
        %vm2024 = vcmp.lt.s32.totalorder %v2004, 2
        %vm2025 = vcmp.lt.s32.totalorder %v2004, 3
        %vm2026 = vcmp.lt.s32.totalorder %v2004, 4
        %v2027 = vsel %vm2023, %v2007, %v2010
        %v2028 = vsel %vm2026, %v2016, 2102212464
        %v2029 = vsel %vm2025, %v2013, %v2028
        %v2030 = vsel %vm2024, %v2027, %v2029
        %v2031 = vsel %vm2023, %v2010, %v2013
        %v2032 = vsel %vm2026, %v2019, 920167782
        %v2033 = vsel %vm2025, %v2016, %v2032
        %v2034 = vsel %vm2024, %v2031, %v2033
        %v2035 = vsel %vm2023, %v2013, %v2016
        %v2036 = vsel %vm2026, %v2022, 1326507024
        %v2037 = vsel %vm2025, %v2019, %v2036
        %v2038 = vsel %vm2024, %v2035, %v2037
        %v2039 = vshll.u32 %v1999, 8
        %v2040 = vand.u32 %v2039, 65535
        %v2041 = vshrl.u32 %v2039, 16
        %v2042 = vand.u32 %v2038, 65535
        %v2043 = vshrl.u32 %v2038, 16
        %v2044 = vmul.u32 %v2040, %v2042
        %v2045 = vmul.u32 %v2040, %v2043
        %v2046 = vmul.u32 %v2041, %v2042
        %v2047 = vmul.u32 %v2041, %v2043
        %v2048 = vshll.u32 %v2045, 16
        %v2049 = vshrl.u32 %v2045, 16
        %v2050 = vshll.u32 %v2046, 16
        %v2051 = vshrl.u32 %v2046, 16
        %vm2052 = vc.u32 %v2044, %v2048
        %v2053 = vsel %vm2052, 1, 0
        %v2054 = vadd.s32 %v2044, %v2048
        %v2055 = vadd.s32 %v2047, %v2053
        %vm2056 = vc.u32 %v2054, %v2050
        %v2057 = vsel %vm2056, 1, 0
        %v2058 = vadd.s32 %v2054, %v2050
        %v2059 = vadd.s32 %v2055, %v2057
        %v2060 = vadd.s32 %v2059, %v2049
        %v2061 = vadd.s32 %v2060, %v2051
        %v2062 = vand.u32 %v2039, 65535
        %v2063 = vshrl.u32 %v2039, 16
        %v2064 = vand.u32 %v2034, 65535
        %v2065 = vshrl.u32 %v2034, 16
        %v2066 = vmul.u32 %v2062, %v2064
        %v2067 = vmul.u32 %v2062, %v2065
        %v2068 = vmul.u32 %v2063, %v2064
        %v2069 = vmul.u32 %v2063, %v2065
        %v2070 = vshll.u32 %v2067, 16
        %v2071 = vshrl.u32 %v2067, 16
        %v2072 = vshll.u32 %v2068, 16
        %v2073 = vshrl.u32 %v2068, 16
        %vm2074 = vc.u32 %v2066, %v2070
        %v2075 = vsel %vm2074, 1, 0
        %v2076 = vadd.s32 %v2066, %v2070
        %v2077 = vadd.s32 %v2069, %v2075
        %vm2078 = vc.u32 %v2076, %v2072
        %v2079 = vsel %vm2078, 1, 0
        %v2080 = vadd.s32 %v2076, %v2072
        %v2081 = vadd.s32 %v2077, %v2079
        %v2082 = vadd.s32 %v2081, %v2071
        %v2083 = vadd.s32 %v2082, %v2073
        %v2084 = vmul.u32 %v2039, %v2030
        %v2085 = vadd.s32 %v2061, %v2080
        %vm2086 = vc.u32 %v2061, %v2080
        %v2087 = vadd.s32 %v2083, 1
        %v2088 = vsel %vm2086, %v2087, %v2083
        %v2089 = vadd.s32 %v2084, %v2088
        %v2090 = vadd.s32 %v2089, 536870912
        %v2091 = vshrl.u32 %v2090, 30
        %v2092 = vshll.u32 %v2091, 30
        %v2093 = vsub.s32 %v2089, %v2092
        %vm2094 = vcmp.lt.s32.totalorder %v2093, 0
        %v2095 = vsub.s32 0, %v2093
        %v2096 = vsel %vm2094, %v2095, %v2093
        %v2097 = vclz %v2096
        %v2098 = vsub.s32 %v2097, 2
        %vm2099 = vcmp.gt.s32.totalorder 0, %v2098
        %v2100 = vsel %vm2099, 0, %v2098
        %v2101 = vsub.s32 32, %v2100
        %v2102 = vshll.u32 %v2093, %v2100
        %v2103 = vshrl.u32 %v2085, %v2101
        %v2104 = vor.u32 %v2102, %v2103
        %v2105 = vsub.s32 4294967266, %v2100
        %v2106 = vadd.s32 %v2105, 127
        %v2107 = vshll.u32 %v2106, 23
        %v2108 = vor.u32 4788187, %v2107
        %v2109 = vand.u32 2147483647, %v2108
        %v2111 = vcvt.s32.f32 %v2104
        %v2112 = vmul.f32 %v2111, %v2109
        %v2113 = vxor.u32 %v2112, 2147483648
        %v2114 = vsel %vm1993, %v2113, %v2112
        %v2115 = vsub.s32 4, %v2091
        %v2116 = vsel %vm1993, %v2115, %v2091
        %v2117 = vsel %vm1992, %v1525, %v2114
        %v2118 = vsel %vm1992, 0, %v2116
        %v2119 = vmul.f32 %v2117, %v2117
        %v2120 = vmul.f32 %v2119, -0.001358992
        %v2121 = vadd.f32 %v2120, 0.041655596
        %v2122 = vmul.f32 %v2119, %v2121
        %v2123 = vadd.f32 %v2122, -0.4999988
        %v2124 = vmul.f32 %v2119, %v2123
        %v2125 = vadd.f32 1.0, %v2124
        %v2126 = vmul.f32 %v2117, %v2117
        %v2127 = vmul.f32 %v2126, -0.00019511016
        %v2128 = vadd.f32 %v2127, 0.008332121
        %v2129 = vmul.f32 %v2126, %v2128
        %v2130 = vadd.f32 %v2129, -0.16666654
        %v2131 = vmul.f32 %v2126, %v2130
        %v2132 = vadd.f32 %v2131, 1.0
        %v2133 = vmul.f32 %v2132, %v2117
        %vm2134 = vweird.f32 %v1525
        %v2135 = vadd.s32 %v2118, 3
        %v2136 = vand.u32 %v2135, 3
        %vm2137 = vcmp.lt.s32.totalorder %v2136, 2
        %vm2138 = vcmp.eq.s32.totalorder %v2136, 0
        %v2139 = vxor.u32 %v2133, 2147483648
        %v2140 = vsel %vm2138, %v2125, %v2139
        %vm2141 = vcmp.eq.s32.totalorder %v2136, 2
        %v2142 = vxor.u32 %v2125, 2147483648
        %v2143 = vsel %vm2141, %v2142, %v2133
        %v2144 = vsel %vm2137, %v2140, %v2143
        %v2145 = vsel %vm2134, nan, %v2144
        %2146 = vst [vmem:[%s211 + $0x20] sm:$0xff] %v1680
        %2147 = vst [vmem:[%s211 + $0x28] sm:$0xff] %v1835
        %2148 = vst [vmem:[%s211 + $0x30] sm:$0xff] %v1990
        %2149 = vst [vmem:[%s211 + $0x38] sm:$0xff] %v2145
        %p2150 = scmp.lt.s32.totalorder %s16, 1
        %s2151 = scalar_select %p2150, %s16, 1
        %s2152 = smul.addr %s2151, 8
        %s2153 = smul.addr %s2152, 8
        %s2154 = scalar_lea.vmem %s4, %s2153
        // Predicated region
        $region41: #{sine_position_embedding.1} parent=35 // pred_check
          %p2155 = pneg %p123
        $region42: #{sine_position_embedding.1} parent=35 // pred_check_branch
          %2157 = sbr.rel (%p2155) target = $region44
        $region43: #{sine_position_embedding.1} parent=35 // pred_region
          _
        $region44: #{sine_position_embedding.1} parent=35 // pred_fallthru
          _
      $region36: #{sine_position_embedding.1} parent=5 // pred_fallthru
        _
      %p2158 = scmp.le.s32.totalorder 2, %s11
      // Predicated region
      $region45: #{sine_position_embedding.1} parent=5 // pred_check
        %p2159 = pneg %p2158
      $region46: #{sine_position_embedding.1} parent=5 // pred_check_branch
        %2161 = sbr.rel (%p2159) target = $region48
      $region47: #{sine_position_embedding.1} parent=5 // pred_region
        %s2162 = ssub.s32 %s11, 2
        // Predicated region
        $region49: #{sine_position_embedding.1} parent=47 // pred_check
          %p2163 = pneg %p129
        $region50: #{sine_position_embedding.1} parent=47 // pred_check_branch
          %2165 = sbr.rel (%p2163) target = $region52
        $region51: #{sine_position_embedding.1} parent=47 // pred_region
          %p2166 = scmp.lt.s32.totalorder %s17, 1
          %s2167 = scalar_select %p2166, %s17, 1
          %s2168 = smul.addr %s2167, 8
          %s2169 = smul.addr %s2168, 8
          %s2170 = scalar_lea.vmem %s4, %s2169
        $region52: #{sine_position_embedding.1} parent=47 // pred_fallthru
          _
      $region48: #{sine_position_embedding.1} parent=5 // pred_fallthru
        _
    $region6: #{sine_position_embedding.1} parent=1 // loop_footer
      %s15 = sadd.s32 1, %s11
    $region7: #{sine_position_embedding.1} parent=1 // loop_footer_branch
      %10 = sbr.rel target = $region3
    $region8: #{sine_position_embedding.1} parent=1 // loop_exit
      _
    %2171 = vsyncpa [#allocation3], 1
    %s2172 = scalar_lea.sflag [#allocation3], 1
    %2173 = vsyncpa %s2172, 1

</llo_original>
